<compile_context>
chip_gen: v5e
topology: v5e:2x2
jax: 0.10.0
libtpu: 0.0.40
codegen_flags: <defaults>
</compile_context>

<pallas_src>
import math

import jax
import jax.numpy as jnp
from jax import lax
from jax.experimental import pallas as pl
from jax.experimental.pallas import tpu as pltpu


def _round_up(x, m):
    return ((x + m - 1) // m) * m


def _two_tensorcores_per_chip():
    """v7x has 2 TensorCores/chip; a 'parallel' grid axis only pays off there."""
    try:
        kind = jax.devices()[0].device_kind.lower()
    except Exception:
        return False
    return "v7" in kind


def _pick_block_b(B, T, C, Hp, H, x_itemsize, out_itemsize, two_tc,
                  vmem_budget_bytes=20 * 1024 * 1024):
    """Largest batch block Bb (divisor of B) whose working set fits the VMEM budget.

    Maximizing Bb fills the MXU M dimension (Bb*T) and amortizes per-grid-step overhead.
    Grid extent 1 is fine on single-TC chips (v5e/v6e); only on v7x do we keep >= 2 grid
    steps, and only when each core still gets a useful amount of work.
    """

    def working_set(bb):
        m = bb * T
        return (2 * m * C * x_itemsize          # double-buffered x block
                + 2 * m * H * out_itemsize      # double-buffered out block
                + C * 3 * Hp * 2                # fused bf16 weight (single-buffered)
                + m * 3 * Hp * 4                # qkv f32 accumulator
                + 2 * bb * T * T * 4)           # ~two live (T, T) f32 temporaries

    # Block first-dim (Bb*T) must be divisible by 8 unless it spans the full array.
    divisors = [d for d in range(1, B + 1)
                if B % d == 0 and (d == B or (d * T) % 8 == 0)]
    fitting = [d for d in divisors if working_set(d) <= vmem_budget_bytes]
    if not fitting:
        fitting = divisors[:1]
    bb = fitting[-1]

    if two_tc and bb == B and B > 1:
        # Shrink just enough to give the second TensorCore a step, preferring
        # Bb*T >= 256 (full MXU rows) or otherwise an even split of the batch.
        for d in reversed(fitting):
            if d < B and (d * T >= 256 or d * T * 2 >= B * T):
                bb = d
                break
    return bb


def _make_head_kernel(Bb, T, H, Hp):
    """Kernel closure over the static tiling parameters."""

    def kernel(x_ref, w_ref, o_ref):
        # x_ref: (Bb*T, C) input dtype; w_ref: (C, 3*Hp) bf16; o_ref: (Bb*T, H)
        M = Bb * T

        # Cast to bf16 in-kernel (no standalone wrapper-side cast / extra HBM pass).
        x = x_ref[...].astype(jnp.bfloat16)

        # Fused q/k/v projection: one wide MXU matmul, bf16 operands, f32 accumulation.
        # 1/sqrt(head_size) is pre-folded into the query columns of w_ref.
        qkv = jnp.dot(x, w_ref[...], preferred_element_type=jnp.float32)  # (M, 3*Hp)
        qkv = qkv.reshape(Bb, T, 3 * Hp)

        q = qkv[:, :, 0 * Hp:1 * Hp].astype(jnp.bfloat16)
        k = qkv[:, :, 1 * Hp:2 * Hp].astype(jnp.bfloat16)
        v = qkv[:, :, 2 * Hp:3 * Hp].astype(jnp.bfloat16)

        # Scores: contract the last dims directly (no XLU transpose of k).
        s = jnp.einsum("bqd,bkd->bqk", q, k,
                       preferred_element_type=jnp.float32)               # (Bb, T, T) f32

        # Causal mask from batch-invariant (T, T) iotas, folded into the exp path.
        row = lax.broadcasted_iota(jnp.int32, (T, T), 0)
        col = lax.broadcasted_iota(jnp.int32, (T, T), 1)
        mask = (col <= row)[None, :, :]                                   # (1, T, T)

        m = jnp.max(jnp.where(mask, s, -jnp.inf), axis=-1, keepdims=True)
        p = jnp.where(mask, jnp.exp(s - m), 0.0)                          # unnormalized
        l = jnp.sum(p, axis=-1, keepdims=True)                            # (Bb, T, 1)

        # TODO(synk): training-mode dropout on the attention weights is omitted
        #             (eval/inference identity semantics).

        out = jnp.einsum("bqk,bkd->bqd", p.astype(jnp.bfloat16), v,
                         preferred_element_type=jnp.float32)              # (Bb, T, Hp)
        # Deferred softmax normalization via EUP approximate reciprocal.
        out = out * pl.reciprocal(l, approx=True)

        # Drop the zero-padded head columns in-kernel (no wrapper-side slice pass).
        o_ref[...] = out.reshape(M, Hp)[:, :H].astype(o_ref.dtype)

    return kernel


def fuse_head_weights(w_key, w_query, w_value):
    """Per-parameter (init-time) work: fuse q/k/v into one zero-padded, pre-scaled bf16
    weight of shape (C, 3*Hp), Hp = round_up(H, 128), column order [q | k | v]."""
    C, H = w_key.shape
    Hp = max(128, _round_up(H, 128))
    scale = 1.0 / math.sqrt(H)

    def pad_h(w):
        return jnp.pad(w, ((0, 0), (0, Hp - H)))

    w_qkv = jnp.concatenate(
        [pad_h(w_query * scale), pad_h(w_key), pad_h(w_value)], axis=1)
    return w_qkv.astype(jnp.bfloat16)


def head_forward(x, w_qkv, head_size):
    """x: (B, T, C); w_qkv: fused (C, 3*Hp) bf16 from fuse_head_weights.
    Returns (B, T, head_size) in x.dtype, matching the PyTorch Head forward (eval mode)."""
    B, T, C = x.shape
    H = head_size
    Hp = w_qkv.shape[1] // 3

    two_tc = _two_tensorcores_per_chip()
    Bb = _pick_block_b(B, T, C, Hp, H, x.dtype.itemsize, x.dtype.itemsize, two_tc)
    M = Bb * T

    # Free contiguous reshape: present a 2D (B*T, C) slab so the projection matmul sees
    # aligned rows without an in-kernel relayout.
    x2 = x.reshape(B * T, C)

    kernel = _make_head_kernel(Bb, T, H, Hp)

    def run(weight_spec):
        return pl.pallas_call(
            kernel,
            out_shape=jax.ShapeDtypeStruct((B * T, H), x.dtype),
            grid_spec=pltpu.PrefetchScalarGridSpec(
                num_scalar_prefetch=0,
                grid=(B // Bb,),
                in_specs=[
                    pl.BlockSpec((M, C), lambda b: (b, 0)),
                    weight_spec,
                ],
                out_specs=pl.BlockSpec((M, H), lambda b: (b, 0)),
            ),
            compiler_params=pltpu.CompilerParams(
                dimension_semantics=("parallel",),
                # Explicit so v5e's 16 MiB default scoped VMEM doesn't force spills.
                vmem_limit_bytes=32 * 1024 * 1024,
            ),
        )(x2, w_qkv)

    # The fused weight block is grid-invariant: a second pipeline buffer is dead VMEM,
    # so request single buffering; fall back cleanly if unsupported on this jax version.
    w_shape = (C, 3 * Hp)
    w_index_map = lambda b: (0, 0)
    try:
        out2 = run(pl.BlockSpec(w_shape, w_index_map,
                                pipeline_mode=pl.Buffered(buffer_count=1)))
    except Exception:
        out2 = run(pl.BlockSpec(w_shape, w_index_map))

    return out2.reshape(B, T, H)


def head_forward_from_params(x, w_key, w_query, w_value):
    """Convenience wrapper; prefer calling fuse_head_weights once at init time."""
    return head_forward(x, fuse_head_weights(w_key, w_query, w_value), w_key.shape[1])


def head_reference(x, w_key, w_query, w_value):
    """Pure-JAX f32 reference mirroring the PyTorch forward (eval mode)."""
    B, T, C = x.shape
    H = w_key.shape[1]
    k = x @ w_key
    q = x @ w_query
    v = x @ w_value
    wei = (q @ jnp.swapaxes(k, -2, -1)) * (1.0 / math.sqrt(H))
    mask = jnp.tril(jnp.ones((T, T), dtype=bool))
    wei = jnp.where(mask[None, :, :], wei, -jnp.inf)
    wei = jax.nn.softmax(wei, axis=-1)
    return wei @ v


if __name__ == "__main__":
    # Small shapes consistent with the module: batch=2, seq T=8 (<= block_size=256),
    # embedding C = n_embd = 512, head_size H = 64.
    B, T, C, H = 2, 8, 512, 64

    key = jax.random.PRNGKey(0)
    kx, kk, kq, kv = jax.random.split(key, 4)

    x = jax.random.normal(kx, (B, T, C), dtype=jnp.float32)
    bound = 1.0 / math.sqrt(C)
    w_key = jax.random.uniform(kk, (C, H), jnp.float32, -bound, bound)
    w_query = jax.random.uniform(kq, (C, H), jnp.float32, -bound, bound)
    w_value = jax.random.uniform(kv, (C, H), jnp.float32, -bound, bound)

    # Parameter-init-time work (per-parameter, not per-token): fuse/pad/scale/cast once.
    w_qkv = jax.block_until_ready(fuse_head_weights(w_key, w_query, w_value))

    out = head_forward(x, w_qkv, H)
    out = jax.block_until_ready(out)

    ref = head_reference(x, w_key, w_query, w_value)
    assert out.shape == (B, T, H)
    # bf16 MXU operands + approx reciprocal -> relaxed tolerance vs the f32 reference;
    # a real bug (mask/slice/scale) would produce O(0.1+) errors and still fail this.
    assert jnp.allclose(out, ref, atol=5e-2, rtol=5e-2), "mismatch vs reference"

    print("KERNEL_OK")
</pallas_src>

<mosaic_0001>
module attributes {stable_mosaic.version = 11 : i64} {
  func.func @kernel(%arg0: i32, %arg1: memref<16x512xf32, #tpu.memory_space<vmem>>, %arg2: memref<512x384xbf16, #tpu.memory_space<vmem>>, %arg3: memref<16x64xf32, #tpu.memory_space<vmem>>) attributes {dimension_semantics = [#tpu.dimension_semantics<parallel>], iteration_bounds = array<i64: 1>, scalar_prefetch = 0 : i64, scratch_operands = 0 : i64, tpu.core_type = #tpu.core_type<tc>, window_params = [{transform_indices = @transform_0, window_bounds = array<i64: 16, 512>}, {pipeline_mode = #tpu.pipeline_mode<synchronous>, transform_indices = @transform_1, window_bounds = array<i64: 512, 384>}, {transform_indices = @transform_2, window_bounds = array<i64: 16, 64>}]} {
    %c0 = arith.constant 0 : index
    %c0_0 = arith.constant 0 : index
    %0 = vector.load %arg1[%c0, %c0_0] : memref<16x512xf32, #tpu.memory_space<vmem>>, vector<16x512xf32>
    %1 = arith.truncf %0 : vector<16x512xf32> to vector<16x512xbf16>
    %c0_1 = arith.constant 0 : index
    %c0_2 = arith.constant 0 : index
    %2 = vector.load %arg2[%c0_1, %c0_2] : memref<512x384xbf16, #tpu.memory_space<vmem>>, vector<512x384xbf16>
    %cst = arith.constant dense<0.000000e+00> : vector<16x384xf32>
    %3 = tpu.matmul %1, %2, %cst {dimension_numbers = #tpu.dot_dimension_numbers<[1], [0], [0], [1], [0, 0, 1, 1], [], []>} : vector<16x512xbf16>, vector<512x384xbf16>, vector<16x384xf32> -> vector<16x384xf32>
    %4 = vector.shape_cast %3 : vector<16x384xf32> to vector<2x8x384xf32>
    %5 = vector.extract_strided_slice %4 {offsets = [0, 0, 0], sizes = [2, 8, 128], strides = [1, 1, 1]} : vector<2x8x384xf32> to vector<2x8x128xf32>
    %6 = arith.truncf %5 : vector<2x8x128xf32> to vector<2x8x128xbf16>
    %7 = vector.extract_strided_slice %4 {offsets = [0, 0, 128], sizes = [2, 8, 128], strides = [1, 1, 1]} : vector<2x8x384xf32> to vector<2x8x128xf32>
    %8 = arith.truncf %7 : vector<2x8x128xf32> to vector<2x8x128xbf16>
    %9 = vector.extract_strided_slice %4 {offsets = [0, 0, 256], sizes = [2, 8, 128], strides = [1, 1, 1]} : vector<2x8x384xf32> to vector<2x8x128xf32>
    %10 = arith.truncf %9 : vector<2x8x128xf32> to vector<2x8x128xbf16>
    "tpu.trace_start"() <{level = 10 : i32, message = "bqd,bkd->bqk"}> : () -> ()
    %cst_3 = arith.constant dense<0.000000e+00> : vector<2x8x8xf32>
    %11 = tpu.matmul %6, %8, %cst_3 {dimension_numbers = #tpu.dot_dimension_numbers<[2], [2], [1], [1], [0, 0, 0, 1, 1, 1], [0], [0]>} : vector<2x8x128xbf16>, vector<2x8x128xbf16>, vector<2x8x8xf32> -> vector<2x8x8xf32>
    "tpu.trace_stop"() : () -> ()
    %12 = tpu.iota {dimensions = array<i32: 0>} : vector<8x8xi32>
    %13 = tpu.iota {dimensions = array<i32: 1>} : vector<8x8xi32>
    %14 = arith.cmpi sle, %13, %12 : vector<8x8xi32>
    %15 = vector.shape_cast %14 : vector<8x8xi1> to vector<1x8x8xi1>
    %cst_4 = arith.constant 0xFF800000 : f32
    %16 = vector.shape_cast %15 : vector<1x8x8xi1> to vector<1x8x8xi1>
    %17 = vector.broadcast %16 : vector<1x8x8xi1> to vector<2x8x8xi1>
    %18 = vector.broadcast %cst_4 : f32 to vector<2x8x8xf32>
    %19 = arith.select %17, %11, %18 : vector<2x8x8xi1>, vector<2x8x8xf32>
    %cst_5 = arith.constant dense<0xFF800000> : vector<2x8xf32>
    %20 = vector.multi_reduction <maximumf>, %19, %cst_5 [2] : vector<2x8x8xf32> to vector<2x8xf32>
    %21 = vector.shape_cast %20 : vector<2x8xf32> to vector<2x8x1xf32>
    %22 = vector.broadcast %21 : vector<2x8x1xf32> to vector<2x8x8xf32>
    %23 = arith.subf %11, %22 : vector<2x8x8xf32>
    %24 = math.exp %23 : vector<2x8x8xf32>
    %cst_6 = arith.constant 0.000000e+00 : f32
    %25 = vector.shape_cast %15 : vector<1x8x8xi1> to vector<1x8x8xi1>
    %26 = vector.broadcast %25 : vector<1x8x8xi1> to vector<2x8x8xi1>
    %27 = vector.broadcast %cst_6 : f32 to vector<2x8x8xf32>
    %28 = arith.select %26, %24, %27 : vector<2x8x8xi1>, vector<2x8x8xf32>
    %cst_7 = arith.constant dense<0.000000e+00> : vector<2x8xf32>
    %29 = vector.multi_reduction <add>, %28, %cst_7 [2] : vector<2x8x8xf32> to vector<2x8xf32>
    %30 = vector.shape_cast %29 : vector<2x8xf32> to vector<2x8x1xf32>
    %31 = arith.truncf %28 : vector<2x8x8xf32> to vector<2x8x8xbf16>
    "tpu.trace_start"() <{level = 10 : i32, message = "bqk,bkd->bqd"}> : () -> ()
    %cst_8 = arith.constant dense<0.000000e+00> : vector<2x8x128xf32>
    %32 = tpu.matmul %31, %10, %cst_8 {dimension_numbers = #tpu.dot_dimension_numbers<[2], [1], [1], [2], [0, 0, 0, 1, 1, 2], [0], [0]>} : vector<2x8x8xbf16>, vector<2x8x128xbf16>, vector<2x8x128xf32> -> vector<2x8x128xf32>
    "tpu.trace_stop"() : () -> ()
    %33 = tpu.reciprocal %30 {approx = true} : vector<2x8x1xf32> -> vector<2x8x1xf32>
    %34 = vector.broadcast %33 : vector<2x8x1xf32> to vector<2x8x128xf32>
    %35 = arith.mulf %32, %34 : vector<2x8x128xf32>
    %36 = vector.shape_cast %35 : vector<2x8x128xf32> to vector<16x128xf32>
    %37 = vector.extract_strided_slice %36 {offsets = [0, 0], sizes = [16, 64], strides = [1, 1]} : vector<16x128xf32> to vector<16x64xf32>
    %c0_9 = arith.constant 0 : index
    %c0_10 = arith.constant 0 : index
    %38 = vector.load %arg3[%c0_9, %c0_10] : memref<16x64xf32, #tpu.memory_space<vmem>>, vector<16x64xf32>
    tpu.vector_store %arg3[%c0_9, %c0_10], %37 {strides = array<i32>} : memref<16x64xf32, #tpu.memory_space<vmem>>, vector<16x64xf32>,
    return
  }
  func.func @transform_0(%arg0: i32) -> (i32, i32) {
    %c0_i32 = arith.constant 0 : i32
    %c0_i32_0 = arith.constant 0 : i32
    return %arg0, %c0_i32 : i32, i32
  }
  func.func @transform_1(%arg0: i32) -> (i32, i32) {
    %c0_i32 = arith.constant 0 : i32
    %c0_i32_0 = arith.constant 0 : i32
    %c0_i32_1 = arith.constant 0 : i32
    return %c0_i32, %c0_i32_0 : i32, i32
  }
  func.func @transform_2(%arg0: i32) -> (i32, i32) {
    %c0_i32 = arith.constant 0 : i32
    %c0_i32_0 = arith.constant 0 : i32
    return %arg0, %c0_i32 : i32, i32
  }
}

module attributes {stable_mosaic.version = 11 : i64} {
  func.func @kernel(%arg0: i32, %arg1: memref<16x512xf32, #tpu.memory_space<vmem>>, %arg2: memref<512x384xbf16, #tpu.memory_space<vmem>>, %arg3: memref<16x64xf32, #tpu.memory_space<vmem>>) attributes {dimension_semantics = [#tpu.dimension_semantics<parallel>], iteration_bounds = array<i64: 1>, scalar_prefetch = 0 : i64, scratch_operands = 0 : i64, tpu.core_type = #tpu.core_type<tc>, window_params = [{transform_indices = @transform_0, window_bounds = array<i64: 16, 512>}, {pipeline_mode = #tpu.pipeline_mode<synchronous>, transform_indices = @transform_1, window_bounds = array<i64: 512, 384>}, {transform_indices = @transform_2, window_bounds = array<i64: 16, 64>}]} {
    %c0 = arith.constant 0 : index
    %c0_0 = arith.constant 0 : index
    %0 = vector.load %arg1[%c0, %c0_0] : memref<16x512xf32, #tpu.memory_space<vmem>>, vector<16x512xf32>
    %1 = arith.truncf %0 : vector<16x512xf32> to vector<16x512xbf16>
    %c0_1 = arith.constant 0 : index
    %c0_2 = arith.constant 0 : index
    %2 = vector.load %arg2[%c0_1, %c0_2] : memref<512x384xbf16, #tpu.memory_space<vmem>>, vector<512x384xbf16>
    %cst = arith.constant dense<0.000000e+00> : vector<16x384xf32>
    %3 = tpu.matmul %1, %2, %cst {dimension_numbers = #tpu.dot_dimension_numbers<[1], [0], [0], [1], [0, 0, 1, 1], [], []>} : vector<16x512xbf16>, vector<512x384xbf16>, vector<16x384xf32> -> vector<16x384xf32>
    %4 = vector.shape_cast %3 : vector<16x384xf32> to vector<2x8x384xf32>
    %5 = vector.extract_strided_slice %4 {offsets = [0, 0, 0], sizes = [2, 8, 128], strides = [1, 1, 1]} : vector<2x8x384xf32> to vector<2x8x128xf32>
    %6 = arith.truncf %5 : vector<2x8x128xf32> to vector<2x8x128xbf16>
    %7 = vector.extract_strided_slice %4 {offsets = [0, 0, 128], sizes = [2, 8, 128], strides = [1, 1, 1]} : vector<2x8x384xf32> to vector<2x8x128xf32>
    %8 = arith.truncf %7 : vector<2x8x128xf32> to vector<2x8x128xbf16>
    %9 = vector.extract_strided_slice %4 {offsets = [0, 0, 256], sizes = [2, 8, 128], strides = [1, 1, 1]} : vector<2x8x384xf32> to vector<2x8x128xf32>
    %10 = arith.truncf %9 : vector<2x8x128xf32> to vector<2x8x128xbf16>
    "tpu.trace_start"() <{level = 10 : i32, message = "bqd,bkd->bqk"}> : () -> ()
    %cst_3 = arith.constant dense<0.000000e+00> : vector<2x8x8xf32>
    %11 = tpu.matmul %6, %8, %cst_3 {dimension_numbers = #tpu.dot_dimension_numbers<[2], [2], [1], [1], [0, 0, 0, 1, 1, 1], [0], [0]>} : vector<2x8x128xbf16>, vector<2x8x128xbf16>, vector<2x8x8xf32> -> vector<2x8x8xf32>
    "tpu.trace_stop"() : () -> ()
    %12 = tpu.iota {dimensions = array<i32: 0>} : vector<8x8xi32>
    %13 = tpu.iota {dimensions = array<i32: 1>} : vector<8x8xi32>
    %14 = arith.cmpi sle, %13, %12 : vector<8x8xi32>
    %15 = vector.shape_cast %14 : vector<8x8xi1> to vector<1x8x8xi1>
    %cst_4 = arith.constant 0xFF800000 : f32
    %16 = vector.shape_cast %15 : vector<1x8x8xi1> to vector<1x8x8xi1>
    %17 = vector.broadcast %16 : vector<1x8x8xi1> to vector<2x8x8xi1>
    %18 = vector.broadcast %cst_4 : f32 to vector<2x8x8xf32>
    %19 = arith.select %17, %11, %18 : vector<2x8x8xi1>, vector<2x8x8xf32>
    %cst_5 = arith.constant dense<0xFF800000> : vector<2x8xf32>
    %20 = vector.multi_reduction <maximumf>, %19, %cst_5 [2] : vector<2x8x8xf32> to vector<2x8xf32>
    %21 = vector.shape_cast %20 : vector<2x8xf32> to vector<2x8x1xf32>
    %22 = vector.broadcast %21 : vector<2x8x1xf32> to vector<2x8x8xf32>
    %23 = arith.subf %11, %22 : vector<2x8x8xf32>
    %24 = math.exp %23 : vector<2x8x8xf32>
    %cst_6 = arith.constant 0.000000e+00 : f32
    %25 = vector.shape_cast %15 : vector<1x8x8xi1> to vector<1x8x8xi1>
    %26 = vector.broadcast %25 : vector<1x8x8xi1> to vector<2x8x8xi1>
    %27 = vector.broadcast %cst_6 : f32 to vector<2x8x8xf32>
    %28 = arith.select %26, %24, %27 : vector<2x8x8xi1>, vector<2x8x8xf32>
    %cst_7 = arith.constant dense<0.000000e+00> : vector<2x8xf32>
    %29 = vector.multi_reduction <add>, %28, %cst_7 [2] : vector<2x8x8xf32> to vector<2x8xf32>
    %30 = vector.shape_cast %29 : vector<2x8xf32> to vector<2x8x1xf32>
    %31 = arith.truncf %28 : vector<2x8x8xf32> to vector<2x8x8xbf16>
    "tpu.trace_start"() <{level = 10 : i32, message = "bqk,bkd->bqd"}> : () -> ()
    %cst_8 = arith.constant dense<0.000000e+00> : vector<2x8x128xf32>
    %32 = tpu.matmul %31, %10, %cst_8 {dimension_numbers = #tpu.dot_dimension_numbers<[2], [1], [1], [2], [0, 0, 0, 1, 1, 2], [0], [0]>} : vector<2x8x8xbf16>, vector<2x8x128xbf16>, vector<2x8x128xf32> -> vector<2x8x128xf32>
    "tpu.trace_stop"() : () -> ()
    %33 = tpu.reciprocal %30 {approx = true} : vector<2x8x1xf32> -> vector<2x8x1xf32>
    %34 = vector.broadcast %33 : vector<2x8x1xf32> to vector<2x8x128xf32>
    %35 = arith.mulf %32, %34 : vector<2x8x128xf32>
    %36 = vector.shape_cast %35 : vector<2x8x128xf32> to vector<16x128xf32>
    %37 = vector.extract_strided_slice %36 {offsets = [0, 0], sizes = [16, 64], strides = [1, 1]} : vector<16x128xf32> to vector<16x64xf32>
    %c0_9 = arith.constant 0 : index
    %c0_10 = arith.constant 0 : index
    %38 = vector.load %arg3[%c0_9, %c0_10] : memref<16x64xf32, #tpu.memory_space<vmem>>, vector<16x64xf32>
    tpu.vector_store %arg3[%c0_9, %c0_10], %37 {strides = array<i32>} : memref<16x64xf32, #tpu.memory_space<vmem>>, vector<16x64xf32>,
    return
  }
  func.func @transform_0(%arg0: i32) -> (i32, i32) {
    %c0_i32 = arith.constant 0 : i32
    %c0_i32_0 = arith.constant 0 : i32
    return %arg0, %c0_i32 : i32, i32
  }
  func.func @transform_1(%arg0: i32) -> (i32, i32) {
    %c0_i32 = arith.constant 0 : i32
    %c0_i32_0 = arith.constant 0 : i32
    %c0_i32_1 = arith.constant 0 : i32
    return %c0_i32, %c0_i32_0 : i32, i32
  }
  func.func @transform_2(%arg0: i32) -> (i32, i32) {
    %c0_i32 = arith.constant 0 : i32
    %c0_i32_0 = arith.constant 0 : i32
    return %arg0, %c0_i32 : i32, i32
  }
}

</mosaic_0001>

<llo_original>
// kernel: tpu_custom_call.1
$region0: #{tpu_custom_call.1}
  #allocation0 [shape = 'u32[]', space=smem, size = 0x4, offset = 0x4, fixed_abs, tag = 'smem constant byte address 0x4 - core index']
  #allocation1 [shape = 'u32[72,128]{1,0:T(1,128)}', space=vmem, size = 0x9000, scoped, tag = 'internal scratch']
  %s0 = inlined_call_operand.hbm [shape: f32[16,512], index: 0, kind: input, shape index: {}]
  %s1 = inlined_call_operand.hbm [shape: bf16[512,384], index: 1, kind: input, shape index: {}]
  %s2 = inlined_call_operand.hbm [shape: f32[16,64], index: 2, kind: output, shape index: {}]
  %s3 = sld [smem:[#allocation0]]
  $region26: #{tpu_custom_call.1} parent=0
    _
  %s5 = ssub.s32 1, %s3
  %s6 = scalar_select 0, %s5, %s3
  $region1: #{tpu_custom_call.1} parent=0
    #allocation2 [shape = 'u8[32768]{0}', space=vmem, size = 0x8000, scoped, tag = 'input window, operand 0, single buffered']
    #allocation3 [shape = 's32[1]{0}', space=sflag, size = 0x4, scoped, tag = 'scoped memory for tpu_custom_call.1']
    #allocation4 [shape = 's32[1]{0}', space=sflag, size = 0x4, scoped, tag = 'scoped memory for tpu_custom_call.1']
    #allocation5 [shape = 'u8[393216]{0}', space=vmem, size = 0x60000, scoped, tag = 'input window, operand 1, single buffered']
    #allocation6 [shape = 's32[1]{0}', space=sflag, size = 0x4, scoped, tag = 'scoped memory for tpu_custom_call.1']
    #allocation7 [shape = 'u8[8192]{0}', space=vmem, size = 0x2000, scoped, tag = 'output window, operand 0, single buffered']
    %7 = vsyncpa [#allocation3], 0
    %8 = vsyncpa [#allocation6], 0
    %9 = vsyncpa [#allocation4], 0
    // Predicated region
    $region2: #{tpu_custom_call.1} parent=1 // pred_check
      _
    $region3: #{tpu_custom_call.1} parent=1 // pred_check_branch
      %11 = sbr.rel (0) target = $region5
    $region4: #{tpu_custom_call.1} parent=1 // pred_region
      %13 = vsyncadd [#allocation3], 0
      %s14 = sshll.u32 %s0, 4
      %s15 = int_to_ptr.hbm [resolvable:$true] %s14
      %s16 = sshll.u32 [#allocation2], 4
      %s17 = int_to_ptr.vmem [resolvable:$true] %s16
      %22 = dma.hbm_to_vmem [thread:$0]  %s15, 1024, %s17, [#allocation3], 512, 512, 32
    $region5: #{tpu_custom_call.1} parent=1 // pred_fallthru
      _
    // Predicated region
    $region6: #{tpu_custom_call.1} parent=1 // pred_check
      _
    $region7: #{tpu_custom_call.1} parent=1 // pred_check_branch
      %24 = sbr.rel (0) target = $region9
    $region8: #{tpu_custom_call.1} parent=1 // pred_region
      %26 = vsyncadd [#allocation6], 0
      %s27 = sshll.u32 %s1, 4
      %s28 = int_to_ptr.hbm [resolvable:$true] %s27
      %s29 = sshll.u32 [#allocation5], 4
      %s30 = int_to_ptr.vmem [resolvable:$true] %s29
      %35 = dma.hbm_to_vmem [thread:$0]  %s28, 12288, %s30, [#allocation6], 192, 192, 12
    $region9: #{tpu_custom_call.1} parent=1 // pred_fallthru
      _
    // Predicated region
    $region10: #{tpu_custom_call.1} parent=1 // pred_check
      _
    $region11: #{tpu_custom_call.1} parent=1 // pred_check_branch
      %37 = sbr.rel (0) target = $region13
    $region12: #{tpu_custom_call.1} parent=1 // pred_region
      %39 = dma.done [#allocation3], 1024
    $region13: #{tpu_custom_call.1} parent=1 // pred_fallthru
      _
    // Predicated region
    $region14: #{tpu_custom_call.1} parent=1 // pred_check
      _
    $region15: #{tpu_custom_call.1} parent=1 // pred_check_branch
      %41 = sbr.rel (0) target = $region17
    $region16: #{tpu_custom_call.1} parent=1 // pred_region
      %43 = dma.done [#allocation6], 12288
    $region17: #{tpu_custom_call.1} parent=1 // pred_fallthru
      _
    %v45 = vld [vmem:[#allocation2] sm:$0xff]
    %v46 = vld [vmem:[#allocation2 + $0x8] sm:$0xff]
    %v47 = vld [vmem:[#allocation2 + $0x10] sm:$0xff]
    %v48 = vld [vmem:[#allocation2 + $0x18] sm:$0xff]
    %v49 = vld [vmem:[#allocation2 + $0x20] sm:$0xff]
    %v50 = vld [vmem:[#allocation2 + $0x28] sm:$0xff]
    %v51 = vld [vmem:[#allocation2 + $0x30] sm:$0xff]
    %v52 = vld [vmem:[#allocation2 + $0x38] sm:$0xff]
    %v53 = vpack.c.bf16 %v49, %v45
    %v54 = vpack.c.bf16 %v50, %v46
    %v55 = vpack.c.bf16 %v51, %v47
    %v56 = vpack.c.bf16 %v52, %v48
    %v57 = vld [vmem:[#allocation5] sm:$0xff]
    %v58 = vld [vmem:[#allocation5 + $0x8] sm:$0xf]
    %v59 = vld [vmem:[#allocation5 + $0xc] sm:$0xff]
    %v60 = vld [vmem:[#allocation5 + $0x14] sm:$0xf]
    %v61 = vld [vmem:[#allocation5 + $0x18] sm:$0xff]
    %v62 = vld [vmem:[#allocation5 + $0x20] sm:$0xf]
    %v63 = vld [vmem:[#allocation5 + $0x24] sm:$0xff]
    %v64 = vld [vmem:[#allocation5 + $0x2c] sm:$0xf]
    %v65 = vld [vmem:[#allocation5 + $0x30] sm:$0xff]
    %v66 = vld [vmem:[#allocation5 + $0x38] sm:$0xf]
    %v67 = vld [vmem:[#allocation5 + $0x3c] sm:$0xff]
    %v68 = vld [vmem:[#allocation5 + $0x44] sm:$0xf]
    %v69 = vld [vmem:[#allocation5 + $0x48] sm:$0xff]
    %v70 = vld [vmem:[#allocation5 + $0x50] sm:$0xf]
    %v71 = vld [vmem:[#allocation5 + $0x54] sm:$0xff]
    %v72 = vld [vmem:[#allocation5 + $0x5c] sm:$0xf]
    %v73 = vld [vmem:[#allocation5 + $0x60] sm:$0xff]
    %v74 = vld [vmem:[#allocation5 + $0x68] sm:$0xf]
    %v75 = vld [vmem:[#allocation5 + $0x6c] sm:$0xff]
    %v76 = vld [vmem:[#allocation5 + $0x74] sm:$0xf]
    %v77 = vld [vmem:[#allocation5 + $0x78] sm:$0xff]
    %v78 = vld [vmem:[#allocation5 + $0x80] sm:$0xf]
    %v79 = vld [vmem:[#allocation5 + $0x84] sm:$0xff]
    %v80 = vld [vmem:[#allocation5 + $0x8c] sm:$0xf]
    %v81 = vld [vmem:[#allocation5 + $0x90] sm:$0xff]
    %v82 = vld [vmem:[#allocation5 + $0x98] sm:$0xf]
    %v83 = vld [vmem:[#allocation5 + $0x9c] sm:$0xff]
    %v84 = vld [vmem:[#allocation5 + $0xa4] sm:$0xf]
    %v85 = vld [vmem:[#allocation5 + $0xa8] sm:$0xff]
    %v86 = vld [vmem:[#allocation5 + $0xb0] sm:$0xf]
    %v87 = vld [vmem:[#allocation5 + $0xb4] sm:$0xff]
    %v88 = vld [vmem:[#allocation5 + $0xbc] sm:$0xf]
    %v89 = vld [vmem:[#allocation5 + $0xc0] sm:$0xff]
    %v90 = vld [vmem:[#allocation5 + $0xc8] sm:$0xf]
    %v91 = vld [vmem:[#allocation5 + $0xcc] sm:$0xff]
    %v92 = vld [vmem:[#allocation5 + $0xd4] sm:$0xf]
    %v93 = vld [vmem:[#allocation5 + $0xd8] sm:$0xff]
    %v94 = vld [vmem:[#allocation5 + $0xe0] sm:$0xf]
    %v95 = vld [vmem:[#allocation5 + $0xe4] sm:$0xff]
    %v96 = vld [vmem:[#allocation5 + $0xec] sm:$0xf]
    %v97 = vld [vmem:[#allocation5 + $0xf0] sm:$0xff]
    %v98 = vld [vmem:[#allocation5 + $0xf8] sm:$0xf]
    %v99 = vld [vmem:[#allocation5 + $0xfc] sm:$0xff]
    %v100 = vld [vmem:[#allocation5 + $0x104] sm:$0xf]
    %v101 = vld [vmem:[#allocation5 + $0x108] sm:$0xff]
    %v102 = vld [vmem:[#allocation5 + $0x110] sm:$0xf]
    %v103 = vld [vmem:[#allocation5 + $0x114] sm:$0xff]
    %v104 = vld [vmem:[#allocation5 + $0x11c] sm:$0xf]
    %v105 = vld [vmem:[#allocation5 + $0x120] sm:$0xff]
    %v106 = vld [vmem:[#allocation5 + $0x128] sm:$0xf]
    %v107 = vld [vmem:[#allocation5 + $0x12c] sm:$0xff]
    %v108 = vld [vmem:[#allocation5 + $0x134] sm:$0xf]
    %v109 = vld [vmem:[#allocation5 + $0x138] sm:$0xff]
    %v110 = vld [vmem:[#allocation5 + $0x140] sm:$0xf]
    %v111 = vld [vmem:[#allocation5 + $0x144] sm:$0xff]
    %v112 = vld [vmem:[#allocation5 + $0x14c] sm:$0xf]
    %v113 = vld [vmem:[#allocation5 + $0x150] sm:$0xff]
    %v114 = vld [vmem:[#allocation5 + $0x158] sm:$0xf]
    %v115 = vld [vmem:[#allocation5 + $0x15c] sm:$0xff]
    %v116 = vld [vmem:[#allocation5 + $0x164] sm:$0xf]
    %v117 = vld [vmem:[#allocation5 + $0x168] sm:$0xff]
    %v118 = vld [vmem:[#allocation5 + $0x170] sm:$0xf]
    %v119 = vld [vmem:[#allocation5 + $0x174] sm:$0xff]
    %v120 = vld [vmem:[#allocation5 + $0x17c] sm:$0xf]
    %v121 = vld [vmem:[#allocation5 + $0x180] sm:$0xff]
    %v122 = vld [vmem:[#allocation5 + $0x188] sm:$0xf]
    %v123 = vld [vmem:[#allocation5 + $0x18c] sm:$0xff]
    %v124 = vld [vmem:[#allocation5 + $0x194] sm:$0xf]
    %v125 = vld [vmem:[#allocation5 + $0x198] sm:$0xff]
    %v126 = vld [vmem:[#allocation5 + $0x1a0] sm:$0xf]
    %v127 = vld [vmem:[#allocation5 + $0x1a4] sm:$0xff]
    %v128 = vld [vmem:[#allocation5 + $0x1ac] sm:$0xf]
    %v129 = vld [vmem:[#allocation5 + $0x1b0] sm:$0xff]
    %v130 = vld [vmem:[#allocation5 + $0x1b8] sm:$0xf]
    %v131 = vld [vmem:[#allocation5 + $0x1bc] sm:$0xff]
    %v132 = vld [vmem:[#allocation5 + $0x1c4] sm:$0xf]
    %v133 = vld [vmem:[#allocation5 + $0x1c8] sm:$0xff]
    %v134 = vld [vmem:[#allocation5 + $0x1d0] sm:$0xf]
    %v135 = vld [vmem:[#allocation5 + $0x1d4] sm:$0xff]
    %v136 = vld [vmem:[#allocation5 + $0x1dc] sm:$0xf]
    %v137 = vld [vmem:[#allocation5 + $0x1e0] sm:$0xff]
    %v138 = vld [vmem:[#allocation5 + $0x1e8] sm:$0xf]
    %v139 = vld [vmem:[#allocation5 + $0x1ec] sm:$0xff]
    %v140 = vld [vmem:[#allocation5 + $0x1f4] sm:$0xf]
    %v141 = vld [vmem:[#allocation5 + $0x1f8] sm:$0xff]
    %v142 = vld [vmem:[#allocation5 + $0x200] sm:$0xf]
    %v143 = vld [vmem:[#allocation5 + $0x204] sm:$0xff]
    %v144 = vld [vmem:[#allocation5 + $0x20c] sm:$0xf]
    %v145 = vld [vmem:[#allocation5 + $0x210] sm:$0xff]
    %v146 = vld [vmem:[#allocation5 + $0x218] sm:$0xf]
    %v147 = vld [vmem:[#allocation5 + $0x21c] sm:$0xff]
    %v148 = vld [vmem:[#allocation5 + $0x224] sm:$0xf]
    %v149 = vld [vmem:[#allocation5 + $0x228] sm:$0xff]
    %v150 = vld [vmem:[#allocation5 + $0x230] sm:$0xf]
    %v151 = vld [vmem:[#allocation5 + $0x234] sm:$0xff]
    %v152 = vld [vmem:[#allocation5 + $0x23c] sm:$0xf]
    %v153 = vld [vmem:[#allocation5 + $0x240] sm:$0xff]
    %v154 = vld [vmem:[#allocation5 + $0x248] sm:$0xf]
    %v155 = vld [vmem:[#allocation5 + $0x24c] sm:$0xff]
    %v156 = vld [vmem:[#allocation5 + $0x254] sm:$0xf]
    %v157 = vld [vmem:[#allocation5 + $0x258] sm:$0xff]
    %v158 = vld [vmem:[#allocation5 + $0x260] sm:$0xf]
    %v159 = vld [vmem:[#allocation5 + $0x264] sm:$0xff]
    %v160 = vld [vmem:[#allocation5 + $0x26c] sm:$0xf]
    %v161 = vld [vmem:[#allocation5 + $0x270] sm:$0xff]
    %v162 = vld [vmem:[#allocation5 + $0x278] sm:$0xf]
    %v163 = vld [vmem:[#allocation5 + $0x27c] sm:$0xff]
    %v164 = vld [vmem:[#allocation5 + $0x284] sm:$0xf]
    %v165 = vld [vmem:[#allocation5 + $0x288] sm:$0xff]
    %v166 = vld [vmem:[#allocation5 + $0x290] sm:$0xf]
    %v167 = vld [vmem:[#allocation5 + $0x294] sm:$0xff]
    %v168 = vld [vmem:[#allocation5 + $0x29c] sm:$0xf]
    %v169 = vld [vmem:[#allocation5 + $0x2a0] sm:$0xff]
    %v170 = vld [vmem:[#allocation5 + $0x2a8] sm:$0xf]
    %v171 = vld [vmem:[#allocation5 + $0x2ac] sm:$0xff]
    %v172 = vld [vmem:[#allocation5 + $0x2b4] sm:$0xf]
    %v173 = vld [vmem:[#allocation5 + $0x2b8] sm:$0xff]
    %v174 = vld [vmem:[#allocation5 + $0x2c0] sm:$0xf]
    %v175 = vld [vmem:[#allocation5 + $0x2c4] sm:$0xff]
    %v176 = vld [vmem:[#allocation5 + $0x2cc] sm:$0xf]
    %v177 = vld [vmem:[#allocation5 + $0x2d0] sm:$0xff]
    %v178 = vld [vmem:[#allocation5 + $0x2d8] sm:$0xf]
    %v179 = vld [vmem:[#allocation5 + $0x2dc] sm:$0xff]
    %v180 = vld [vmem:[#allocation5 + $0x2e4] sm:$0xf]
    %v181 = vld [vmem:[#allocation5 + $0x2e8] sm:$0xff]
    %v182 = vld [vmem:[#allocation5 + $0x2f0] sm:$0xf]
    %v183 = vld [vmem:[#allocation5 + $0x2f4] sm:$0xff]
    %v184 = vld [vmem:[#allocation5 + $0x2fc] sm:$0xf]
    %v313 = vunpack.c.l.b16 %v57
    %v314 = vunpack.c.h.b16 %v57
    %v315 = vunpack.c.l.b16 %v58
    %v316 = vunpack.c.l.b16 %v59
    %v317 = vunpack.c.h.b16 %v59
    %v318 = vunpack.c.l.b16 %v60
    %v319 = vunpack.c.l.b16 %v61
    %v320 = vunpack.c.h.b16 %v61
    %v321 = vunpack.c.l.b16 %v62
    %v322 = vunpack.c.l.b16 %v63
    %v323 = vunpack.c.h.b16 %v63
    %v324 = vunpack.c.l.b16 %v64
    %v325 = vunpack.c.l.b16 %v65
    %v326 = vunpack.c.h.b16 %v65
    %v327 = vunpack.c.l.b16 %v66
    %v328 = vunpack.c.l.b16 %v67
    %v329 = vunpack.c.h.b16 %v67
    %v330 = vunpack.c.l.b16 %v68
    %v331 = vunpack.c.l.b16 %v69
    %v332 = vunpack.c.h.b16 %v69
    %v333 = vunpack.c.l.b16 %v70
    %v334 = vunpack.c.l.b16 %v71
    %v335 = vunpack.c.h.b16 %v71
    %v336 = vunpack.c.l.b16 %v72
    %v337 = vunpack.c.l.b16 %v73
    %v338 = vunpack.c.h.b16 %v73
    %v339 = vunpack.c.l.b16 %v74
    %v340 = vunpack.c.l.b16 %v75
    %v341 = vunpack.c.h.b16 %v75
    %v342 = vunpack.c.l.b16 %v76
    %v343 = vunpack.c.l.b16 %v77
    %v344 = vunpack.c.h.b16 %v77
    %v345 = vunpack.c.l.b16 %v78
    %v346 = vunpack.c.l.b16 %v79
    %v347 = vunpack.c.h.b16 %v79
    %v348 = vunpack.c.l.b16 %v80
    %v349 = vunpack.c.l.b16 %v81
    %v350 = vunpack.c.h.b16 %v81
    %v351 = vunpack.c.l.b16 %v82
    %v352 = vunpack.c.l.b16 %v83
    %v353 = vunpack.c.h.b16 %v83
    %v354 = vunpack.c.l.b16 %v84
    %v355 = vunpack.c.l.b16 %v85
    %v356 = vunpack.c.h.b16 %v85
    %v357 = vunpack.c.l.b16 %v86
    %v358 = vunpack.c.l.b16 %v87
    %v359 = vunpack.c.h.b16 %v87
    %v360 = vunpack.c.l.b16 %v88
    %v361 = vunpack.c.l.b16 %v89
    %v362 = vunpack.c.h.b16 %v89
    %v363 = vunpack.c.l.b16 %v90
    %v364 = vunpack.c.l.b16 %v91
    %v365 = vunpack.c.h.b16 %v91
    %v366 = vunpack.c.l.b16 %v92
    %v367 = vunpack.c.l.b16 %v93
    %v368 = vunpack.c.h.b16 %v93
    %v369 = vunpack.c.l.b16 %v94
    %v370 = vunpack.c.l.b16 %v95
    %v371 = vunpack.c.h.b16 %v95
    %v372 = vunpack.c.l.b16 %v96
    %v373 = vunpack.c.l.b16 %v97
    %v374 = vunpack.c.h.b16 %v97
    %v375 = vunpack.c.l.b16 %v98
    %v376 = vunpack.c.l.b16 %v99
    %v377 = vunpack.c.h.b16 %v99
    %v378 = vunpack.c.l.b16 %v100
    %v379 = vunpack.c.l.b16 %v101
    %v380 = vunpack.c.h.b16 %v101
    %v381 = vunpack.c.l.b16 %v102
    %v382 = vunpack.c.l.b16 %v103
    %v383 = vunpack.c.h.b16 %v103
    %v384 = vunpack.c.l.b16 %v104
    %v385 = vunpack.c.l.b16 %v105
    %v386 = vunpack.c.h.b16 %v105
    %v387 = vunpack.c.l.b16 %v106
    %v388 = vunpack.c.l.b16 %v107
    %v389 = vunpack.c.h.b16 %v107
    %v390 = vunpack.c.l.b16 %v108
    %v391 = vunpack.c.l.b16 %v109
    %v392 = vunpack.c.h.b16 %v109
    %v393 = vunpack.c.l.b16 %v110
    %v394 = vunpack.c.l.b16 %v111
    %v395 = vunpack.c.h.b16 %v111
    %v396 = vunpack.c.l.b16 %v112
    %v397 = vunpack.c.l.b16 %v113
    %v398 = vunpack.c.h.b16 %v113
    %v399 = vunpack.c.l.b16 %v114
    %v400 = vunpack.c.l.b16 %v115
    %v401 = vunpack.c.h.b16 %v115
    %v402 = vunpack.c.l.b16 %v116
    %v403 = vunpack.c.l.b16 %v117
    %v404 = vunpack.c.h.b16 %v117
    %v405 = vunpack.c.l.b16 %v118
    %v406 = vunpack.c.l.b16 %v119
    %v407 = vunpack.c.h.b16 %v119
    %v408 = vunpack.c.l.b16 %v120
    %v409 = vunpack.c.l.b16 %v121
    %v410 = vunpack.c.h.b16 %v121
    %v411 = vunpack.c.l.b16 %v122
    %v412 = vunpack.c.l.b16 %v123
    %v413 = vunpack.c.h.b16 %v123
    %v414 = vunpack.c.l.b16 %v124
    %v415 = vunpack.c.l.b16 %v125
    %v416 = vunpack.c.h.b16 %v125
    %v417 = vunpack.c.l.b16 %v126
    %v418 = vunpack.c.l.b16 %v127
    %v419 = vunpack.c.h.b16 %v127
    %v420 = vunpack.c.l.b16 %v128
    %v421 = vunpack.c.l.b16 %v129
    %v422 = vunpack.c.h.b16 %v129
    %v423 = vunpack.c.l.b16 %v130
    %v424 = vunpack.c.l.b16 %v131
    %v425 = vunpack.c.h.b16 %v131
    %v426 = vunpack.c.l.b16 %v132
    %v427 = vunpack.c.l.b16 %v133
    %v428 = vunpack.c.h.b16 %v133
    %v429 = vunpack.c.l.b16 %v134
    %v430 = vunpack.c.l.b16 %v135
    %v431 = vunpack.c.h.b16 %v135
    %v432 = vunpack.c.l.b16 %v136
    %v433 = vunpack.c.l.b16 %v137
    %v434 = vunpack.c.h.b16 %v137
    %v435 = vunpack.c.l.b16 %v138
    %v436 = vunpack.c.l.b16 %v139
    %v437 = vunpack.c.h.b16 %v139
    %v438 = vunpack.c.l.b16 %v140
    %v439 = vunpack.c.l.b16 %v141
    %v440 = vunpack.c.h.b16 %v141
    %v441 = vunpack.c.l.b16 %v142
    %v442 = vunpack.c.l.b16 %v143
    %v443 = vunpack.c.h.b16 %v143
    %v444 = vunpack.c.l.b16 %v144
    %v445 = vunpack.c.l.b16 %v145
    %v446 = vunpack.c.h.b16 %v145
    %v447 = vunpack.c.l.b16 %v146
    %v448 = vunpack.c.l.b16 %v147
    %v449 = vunpack.c.h.b16 %v147
    %v450 = vunpack.c.l.b16 %v148
    %v451 = vunpack.c.l.b16 %v149
    %v452 = vunpack.c.h.b16 %v149
    %v453 = vunpack.c.l.b16 %v150
    %v454 = vunpack.c.l.b16 %v151
    %v455 = vunpack.c.h.b16 %v151
    %v456 = vunpack.c.l.b16 %v152
    %v457 = vunpack.c.l.b16 %v153
    %v458 = vunpack.c.h.b16 %v153
    %v459 = vunpack.c.l.b16 %v154
    %v460 = vunpack.c.l.b16 %v155
    %v461 = vunpack.c.h.b16 %v155
    %v462 = vunpack.c.l.b16 %v156
    %v463 = vunpack.c.l.b16 %v157
    %v464 = vunpack.c.h.b16 %v157
    %v465 = vunpack.c.l.b16 %v158
    %v466 = vunpack.c.l.b16 %v159
    %v467 = vunpack.c.h.b16 %v159
    %v468 = vunpack.c.l.b16 %v160
    %v469 = vunpack.c.l.b16 %v161
    %v470 = vunpack.c.h.b16 %v161
    %v471 = vunpack.c.l.b16 %v162
    %v472 = vunpack.c.l.b16 %v163
    %v473 = vunpack.c.h.b16 %v163
    %v474 = vunpack.c.l.b16 %v164
    %v475 = vunpack.c.l.b16 %v165
    %v476 = vunpack.c.h.b16 %v165
    %v477 = vunpack.c.l.b16 %v166
    %v478 = vunpack.c.l.b16 %v167
    %v479 = vunpack.c.h.b16 %v167
    %v480 = vunpack.c.l.b16 %v168
    %v481 = vunpack.c.l.b16 %v169
    %v482 = vunpack.c.h.b16 %v169
    %v483 = vunpack.c.l.b16 %v170
    %v484 = vunpack.c.l.b16 %v171
    %v485 = vunpack.c.h.b16 %v171
    %v486 = vunpack.c.l.b16 %v172
    %v487 = vunpack.c.l.b16 %v173
    %v488 = vunpack.c.h.b16 %v173
    %v489 = vunpack.c.l.b16 %v174
    %v490 = vunpack.c.l.b16 %v175
    %v491 = vunpack.c.h.b16 %v175
    %v492 = vunpack.c.l.b16 %v176
    %v493 = vunpack.c.l.b16 %v177
    %v494 = vunpack.c.h.b16 %v177
    %v495 = vunpack.c.l.b16 %v178
    %v496 = vunpack.c.l.b16 %v179
    %v497 = vunpack.c.h.b16 %v179
    %v498 = vunpack.c.l.b16 %v180
    %v499 = vunpack.c.l.b16 %v181
    %v500 = vunpack.c.h.b16 %v181
    %v501 = vunpack.c.l.b16 %v182
    %v502 = vunpack.c.l.b16 %v183
    %v503 = vunpack.c.h.b16 %v183
    %v504 = vunpack.c.l.b16 %v184
    %v505 = vpack.c.b16 %v316, %v313
    %v506 = vpack.c.b16 %v317, %v314
    %v507 = vpack.c.b16 %v318, %v315
    %v508 = vpack.c.b16 %v322, %v319
    %v509 = vpack.c.b16 %v323, %v320
    %v510 = vpack.c.b16 %v324, %v321
    %v511 = vpack.c.b16 %v328, %v325
    %v512 = vpack.c.b16 %v329, %v326
    %v513 = vpack.c.b16 %v330, %v327
    %v514 = vpack.c.b16 %v334, %v331
    %v515 = vpack.c.b16 %v335, %v332
    %v516 = vpack.c.b16 %v336, %v333
    %v517 = vpack.c.b16 %v340, %v337
    %v518 = vpack.c.b16 %v341, %v338
    %v519 = vpack.c.b16 %v342, %v339
    %v520 = vpack.c.b16 %v346, %v343
    %v521 = vpack.c.b16 %v347, %v344
    %v522 = vpack.c.b16 %v348, %v345
    %v523 = vpack.c.b16 %v352, %v349
    %v524 = vpack.c.b16 %v353, %v350
    %v525 = vpack.c.b16 %v354, %v351
    %v526 = vpack.c.b16 %v358, %v355
    %v527 = vpack.c.b16 %v359, %v356
    %v528 = vpack.c.b16 %v360, %v357
    %v529 = vpack.c.b16 %v364, %v361
    %v530 = vpack.c.b16 %v365, %v362
    %v531 = vpack.c.b16 %v366, %v363
    %v532 = vpack.c.b16 %v370, %v367
    %v533 = vpack.c.b16 %v371, %v368
    %v534 = vpack.c.b16 %v372, %v369
    %v535 = vpack.c.b16 %v376, %v373
    %v536 = vpack.c.b16 %v377, %v374
    %v537 = vpack.c.b16 %v378, %v375
    %v538 = vpack.c.b16 %v382, %v379
    %v539 = vpack.c.b16 %v383, %v380
    %v540 = vpack.c.b16 %v384, %v381
    %v541 = vpack.c.b16 %v388, %v385
    %v542 = vpack.c.b16 %v389, %v386
    %v543 = vpack.c.b16 %v390, %v387
    %v544 = vpack.c.b16 %v394, %v391
    %v545 = vpack.c.b16 %v395, %v392
    %v546 = vpack.c.b16 %v396, %v393
    %v547 = vpack.c.b16 %v400, %v397
    %v548 = vpack.c.b16 %v401, %v398
    %v549 = vpack.c.b16 %v402, %v399
    %v550 = vpack.c.b16 %v406, %v403
    %v551 = vpack.c.b16 %v407, %v404
    %v552 = vpack.c.b16 %v408, %v405
    %v553 = vpack.c.b16 %v412, %v409
    %v554 = vpack.c.b16 %v413, %v410
    %v555 = vpack.c.b16 %v414, %v411
    %v556 = vpack.c.b16 %v418, %v415
    %v557 = vpack.c.b16 %v419, %v416
    %v558 = vpack.c.b16 %v420, %v417
    %v559 = vpack.c.b16 %v424, %v421
    %v560 = vpack.c.b16 %v425, %v422
    %v561 = vpack.c.b16 %v426, %v423
    %v562 = vpack.c.b16 %v430, %v427
    %v563 = vpack.c.b16 %v431, %v428
    %v564 = vpack.c.b16 %v432, %v429
    %v565 = vpack.c.b16 %v436, %v433
    %v566 = vpack.c.b16 %v437, %v434
    %v567 = vpack.c.b16 %v438, %v435
    %v568 = vpack.c.b16 %v442, %v439
    %v569 = vpack.c.b16 %v443, %v440
    %v570 = vpack.c.b16 %v444, %v441
    %v571 = vpack.c.b16 %v448, %v445
    %v572 = vpack.c.b16 %v449, %v446
    %v573 = vpack.c.b16 %v450, %v447
    %v574 = vpack.c.b16 %v454, %v451
    %v575 = vpack.c.b16 %v455, %v452
    %v576 = vpack.c.b16 %v456, %v453
    %v577 = vpack.c.b16 %v460, %v457
    %v578 = vpack.c.b16 %v461, %v458
    %v579 = vpack.c.b16 %v462, %v459
    %v580 = vpack.c.b16 %v466, %v463
    %v581 = vpack.c.b16 %v467, %v464
    %v582 = vpack.c.b16 %v468, %v465
    %v583 = vpack.c.b16 %v472, %v469
    %v584 = vpack.c.b16 %v473, %v470
    %v585 = vpack.c.b16 %v474, %v471
    %v586 = vpack.c.b16 %v478, %v475
    %v587 = vpack.c.b16 %v479, %v476
    %v588 = vpack.c.b16 %v480, %v477
    %v589 = vpack.c.b16 %v484, %v481
    %v590 = vpack.c.b16 %v485, %v482
    %v591 = vpack.c.b16 %v486, %v483
    %v592 = vpack.c.b16 %v490, %v487
    %v593 = vpack.c.b16 %v491, %v488
    %v594 = vpack.c.b16 %v492, %v489
    %v595 = vpack.c.b16 %v496, %v493
    %v596 = vpack.c.b16 %v497, %v494
    %v597 = vpack.c.b16 %v498, %v495
    %v598 = vpack.c.b16 %v502, %v499
    %v599 = vpack.c.b16 %v503, %v500
    %v600 = vpack.c.b16 %v504, %v501
    %697 = vmatpush.bf16.msra.mxu0 %v526
    %698 = vmatpush.bf16.msra.mxu0 %v523
    %699 = vmatpush.bf16.msra.mxu0 %v520
    %700 = vmatpush.bf16.msra.mxu0 %v517
    %701 = vmatpush.bf16.msra.mxu0 %v514
    %702 = vmatpush.bf16.msra.mxu0 %v511
    %703 = vmatpush.bf16.msra.mxu0 %v508
    %704 = vmatpush.bf16.msra.mxu0 %v505
    %705 = vmatmul.bf16.gmra.mxu0 %v53
    %v706 = vpop.f32.mrf.mxu0
    %v707 = vadd.f32 0.0, %v706
    %v708 = vpop.f32.mrf.mxu0
    %v709 = vadd.f32 0.0, %v708
    %710 = vdwg.mxu0
    %711 = vmatpush.bf16.msra.mxu0 %v550
    %712 = vmatpush.bf16.msra.mxu0 %v547
    %713 = vmatpush.bf16.msra.mxu0 %v544
    %714 = vmatpush.bf16.msra.mxu0 %v541
    %715 = vmatpush.bf16.msra.mxu0 %v538
    %716 = vmatpush.bf16.msra.mxu0 %v535
    %717 = vmatpush.bf16.msra.mxu0 %v532
    %718 = vmatpush.bf16.msra.mxu0 %v529
    %719 = vmatmul.bf16.gmra.mxu0 %v54
    %v720 = vpop.f32.mrf.mxu0
    %v721 = vadd.f32 %v707, %v720
    %v722 = vpop.f32.mrf.mxu0
    %v723 = vadd.f32 %v709, %v722
    %724 = vdwg.mxu0
    %725 = vmatpush.bf16.msra.mxu0 %v574
    %726 = vmatpush.bf16.msra.mxu0 %v571
    %727 = vmatpush.bf16.msra.mxu0 %v568
    %728 = vmatpush.bf16.msra.mxu0 %v565
    %729 = vmatpush.bf16.msra.mxu0 %v562
    %730 = vmatpush.bf16.msra.mxu0 %v559
    %731 = vmatpush.bf16.msra.mxu0 %v556
    %732 = vmatpush.bf16.msra.mxu0 %v553
    %733 = vmatmul.bf16.gmra.mxu0 %v55
    %v734 = vpop.f32.mrf.mxu0
    %v735 = vadd.f32 %v721, %v734
    %v736 = vpop.f32.mrf.mxu0
    %v737 = vadd.f32 %v723, %v736
    %738 = vdwg.mxu0
    %739 = vmatpush.bf16.msra.mxu0 %v598
    %740 = vmatpush.bf16.msra.mxu0 %v595
    %741 = vmatpush.bf16.msra.mxu0 %v592
    %742 = vmatpush.bf16.msra.mxu0 %v589
    %743 = vmatpush.bf16.msra.mxu0 %v586
    %744 = vmatpush.bf16.msra.mxu0 %v583
    %745 = vmatpush.bf16.msra.mxu0 %v580
    %746 = vmatpush.bf16.msra.mxu0 %v577
    %747 = vmatmul.bf16.gmra.mxu0 %v56
    %v748 = vpop.f32.mrf.mxu0
    %v749 = vadd.f32 %v735, %v748
    %v750 = vpop.f32.mrf.mxu0
    %v751 = vadd.f32 %v737, %v750
    %752 = vdwg.mxu0
    %753 = vmatpush.bf16.msra.mxu0 %v527
    %754 = vmatpush.bf16.msra.mxu0 %v524
    %755 = vmatpush.bf16.msra.mxu0 %v521
    %756 = vmatpush.bf16.msra.mxu0 %v518
    %757 = vmatpush.bf16.msra.mxu0 %v515
    %758 = vmatpush.bf16.msra.mxu0 %v512
    %759 = vmatpush.bf16.msra.mxu0 %v509
    %760 = vmatpush.bf16.msra.mxu0 %v506
    %761 = vmatmul.bf16.gmra.mxu0 %v53
    %v762 = vpop.f32.mrf.mxu0
    %v763 = vadd.f32 0.0, %v762
    %v764 = vpop.f32.mrf.mxu0
    %v765 = vadd.f32 0.0, %v764
    %766 = vdwg.mxu0
    %767 = vmatpush.bf16.msra.mxu0 %v551
    %768 = vmatpush.bf16.msra.mxu0 %v548
    %769 = vmatpush.bf16.msra.mxu0 %v545
    %770 = vmatpush.bf16.msra.mxu0 %v542
    %771 = vmatpush.bf16.msra.mxu0 %v539
    %772 = vmatpush.bf16.msra.mxu0 %v536
    %773 = vmatpush.bf16.msra.mxu0 %v533
    %774 = vmatpush.bf16.msra.mxu0 %v530
    %775 = vmatmul.bf16.gmra.mxu0 %v54
    %v776 = vpop.f32.mrf.mxu0
    %v777 = vadd.f32 %v763, %v776
    %v778 = vpop.f32.mrf.mxu0
    %v779 = vadd.f32 %v765, %v778
    %780 = vdwg.mxu0
    %781 = vmatpush.bf16.msra.mxu0 %v575
    %782 = vmatpush.bf16.msra.mxu0 %v572
    %783 = vmatpush.bf16.msra.mxu0 %v569
    %784 = vmatpush.bf16.msra.mxu0 %v566
    %785 = vmatpush.bf16.msra.mxu0 %v563
    %786 = vmatpush.bf16.msra.mxu0 %v560
    %787 = vmatpush.bf16.msra.mxu0 %v557
    %788 = vmatpush.bf16.msra.mxu0 %v554
    %789 = vmatmul.bf16.gmra.mxu0 %v55
    %v790 = vpop.f32.mrf.mxu0
    %v791 = vadd.f32 %v777, %v790
    %v792 = vpop.f32.mrf.mxu0
    %v793 = vadd.f32 %v779, %v792
    %794 = vdwg.mxu0
    %795 = vmatpush.bf16.msra.mxu0 %v599
    %796 = vmatpush.bf16.msra.mxu0 %v596
    %797 = vmatpush.bf16.msra.mxu0 %v593
    %798 = vmatpush.bf16.msra.mxu0 %v590
    %799 = vmatpush.bf16.msra.mxu0 %v587
    %800 = vmatpush.bf16.msra.mxu0 %v584
    %801 = vmatpush.bf16.msra.mxu0 %v581
    %802 = vmatpush.bf16.msra.mxu0 %v578
    %803 = vmatmul.bf16.gmra.mxu0 %v56
    %v804 = vpop.f32.mrf.mxu0
    %v805 = vadd.f32 %v791, %v804
    %v806 = vpop.f32.mrf.mxu0
    %v807 = vadd.f32 %v793, %v806
    %808 = vdwg.mxu0
    %809 = vmatpush.bf16.msra.mxu0 %v528
    %810 = vmatpush.bf16.msra.mxu0 %v525
    %811 = vmatpush.bf16.msra.mxu0 %v522
    %812 = vmatpush.bf16.msra.mxu0 %v519
    %813 = vmatpush.bf16.msra.mxu0 %v516
    %814 = vmatpush.bf16.msra.mxu0 %v513
    %815 = vmatpush.bf16.msra.mxu0 %v510
    %816 = vmatpush.bf16.msra.mxu0 %v507
    %817 = vmatmul.bf16.gmra.mxu0 %v53
    %v818 = vpop.f32.mrf.mxu0
    %v819 = vadd.f32 0.0, %v818
    %v820 = vpop.f32.mrf.mxu0
    %v821 = vadd.f32 0.0, %v820
    %822 = vdwg.mxu0
    %823 = vmatpush.bf16.msra.mxu0 %v552
    %824 = vmatpush.bf16.msra.mxu0 %v549
    %825 = vmatpush.bf16.msra.mxu0 %v546
    %826 = vmatpush.bf16.msra.mxu0 %v543
    %827 = vmatpush.bf16.msra.mxu0 %v540
    %828 = vmatpush.bf16.msra.mxu0 %v537
    %829 = vmatpush.bf16.msra.mxu0 %v534
    %830 = vmatpush.bf16.msra.mxu0 %v531
    %831 = vmatmul.bf16.gmra.mxu0 %v54
    %v832 = vpop.f32.mrf.mxu0
    %v833 = vadd.f32 %v819, %v832
    %v834 = vpop.f32.mrf.mxu0
    %v835 = vadd.f32 %v821, %v834
    %836 = vdwg.mxu0
    %837 = vmatpush.bf16.msra.mxu0 %v576
    %838 = vmatpush.bf16.msra.mxu0 %v573
    %839 = vmatpush.bf16.msra.mxu0 %v570
    %840 = vmatpush.bf16.msra.mxu0 %v567
    %841 = vmatpush.bf16.msra.mxu0 %v564
    %842 = vmatpush.bf16.msra.mxu0 %v561
    %843 = vmatpush.bf16.msra.mxu0 %v558
    %844 = vmatpush.bf16.msra.mxu0 %v555
    %845 = vmatmul.bf16.gmra.mxu0 %v55
    %v846 = vpop.f32.mrf.mxu0
    %v847 = vadd.f32 %v833, %v846
    %v848 = vpop.f32.mrf.mxu0
    %v849 = vadd.f32 %v835, %v848
    %850 = vdwg.mxu0
    %851 = vmatpush.bf16.msra.mxu0 %v600
    %852 = vmatpush.bf16.msra.mxu0 %v597
    %853 = vmatpush.bf16.msra.mxu0 %v594
    %854 = vmatpush.bf16.msra.mxu0 %v591
    %855 = vmatpush.bf16.msra.mxu0 %v588
    %856 = vmatpush.bf16.msra.mxu0 %v585
    %857 = vmatpush.bf16.msra.mxu0 %v582
    %858 = vmatpush.bf16.msra.mxu0 %v579
    %859 = vmatmul.bf16.gmra.mxu0 %v56
    %v860 = vpop.f32.mrf.mxu0
    %v861 = vadd.f32 %v847, %v860
    %v862 = vpop.f32.mrf.mxu0
    %v863 = vadd.f32 %v849, %v862
    %864 = vdwg.mxu0
    %v865 = vpack.c.bf16 %v749, %v749
    %v866 = vpack.c.bf16 %v751, %v751
    %v867 = vpack.c.bf16 %v805, %v805
    %v868 = vpack.c.bf16 %v807, %v807
    %v869 = vpack.c.bf16 %v861, %v861
    %v870 = vpack.c.bf16 %v863, %v863
    %871 = vmatpush.bf16.xpose.msra.mxu0 0
    %872 = vmatpush.bf16.xpose.msra.mxu0 0
    %873 = vmatpush.bf16.xpose.msra.mxu0 0
    %874 = vmatpush.bf16.xpose.msra.mxu0 0
    %875 = vmatpush.bf16.xpose.msra.mxu0 0
    %876 = vmatpush.bf16.xpose.msra.mxu0 0
    %877 = vmatpush.bf16.xpose.msra.mxu0 0
    %878 = vmatpush.bf16.xpose.msra.mxu0 %v867
    %879 = vmatmul.bf16.gmra.mxu0 %v865
    %v880 = vpop.f32.mrf.mxu0
    %v881 = vadd.f32 0.0, %v880
    %v882 = vpop.f32.mrf.mxu0
    %883 = vdwg.mxu0
    %884 = vmatpush.bf16.xpose.msra.mxu0 0
    %885 = vmatpush.bf16.xpose.msra.mxu0 0
    %886 = vmatpush.bf16.xpose.msra.mxu0 0
    %887 = vmatpush.bf16.xpose.msra.mxu0 0
    %888 = vmatpush.bf16.xpose.msra.mxu0 0
    %889 = vmatpush.bf16.xpose.msra.mxu0 0
    %890 = vmatpush.bf16.xpose.msra.mxu0 0
    %891 = vmatpush.bf16.xpose.msra.mxu0 %v868
    %892 = vmatmul.bf16.gmra.mxu0 %v866
    %v893 = vpop.f32.mrf.mxu0
    %v894 = vadd.f32 0.0, %v893
    %v895 = vpop.f32.mrf.mxu0
    %896 = vdwg.mxu0
    %v897 = vlaneseq
    %v898 = vshrl.u32 %v897, 7
    %v899 = vlaneseq
    %v900 = vand.u32 %v899, 127
    %vm901 = vcmp.le.s32.totalorder %v900, %v898
    %v902 = vsel %vm901, 1, 0
    %vm903 = vcmp.eq.s32.totalorder %v902, 1
    %v904 = vsel %vm903, %v881, -inf
    %v905 = vsel %vm903, %v894, -inf
    %vm906 = vcmask 64512
    %v907 = vsel %vm906, %v904, -inf
    %908 = vmax.xlane.f32.xlu0 %v907
    %v909 = vpop.xlane.xlu0 %908
    %v910 = vsel %vm906, %v905, -inf
    %911 = vmax.xlane.f32.xlu0 %v910
    %v912 = vpop.xlane.xlu0 %911
    %v913 = vsub.f32 %v881, %v909
    %v914 = vsub.f32 %v894, %v912
    %v915 = vmul.f32 %v913, 1.442695
    %v916 = vpow.pop %v915
    %v917 = vmul.f32 %v914, 1.442695
    %v918 = vpow.pop %v917
    %v919 = vsel %vm903, %v916, 0.0
    %v920 = vsel %vm903, %v918, 0.0
    %v921 = vsel %vm906, %v919, 0.0
    %922 = vadd.xlane.f32.xlu0 %v921
    %v923 = vpop.xlane.xlu0 %922
    %v924 = vsel %vm906, %v920, 0.0
    %925 = vadd.xlane.f32.xlu0 %v924
    %v926 = vpop.xlane.xlu0 %925
    %v927 = vpack.c.bf16 %v919, %v919
    %v928 = vpack.c.bf16 %v920, %v920
    %v930 = vsel %vm906, %v927, 0
    %vm932 = vcmask 1043456
    %v934 = vsel %vm932, %v869, 0
    %936 = vmatpush.bf16.msra.mxu0 0
    %937 = vmatpush.bf16.msra.mxu0 0
    %938 = vmatpush.bf16.msra.mxu0 0
    %939 = vmatpush.bf16.msra.mxu0 0
    %940 = vmatpush.bf16.msra.mxu0 0
    %941 = vmatpush.bf16.msra.mxu0 0
    %942 = vmatpush.bf16.msra.mxu0 0
    %943 = vmatpush.bf16.msra.mxu0 %v934
    %944 = vmatmul.bf16.gmra.mxu0 %v930
    %v945 = vpop.f32.mrf.mxu0
    %v946 = vadd.f32 0.0, %v945
    %v947 = vpop.f32.mrf.mxu0
    %948 = vdwg.mxu0
    %v950 = vsel %vm906, %v928, 0
    %v953 = vsel %vm932, %v870, 0
    %955 = vmatpush.bf16.msra.mxu0 0
    %956 = vmatpush.bf16.msra.mxu0 0
    %957 = vmatpush.bf16.msra.mxu0 0
    %958 = vmatpush.bf16.msra.mxu0 0
    %959 = vmatpush.bf16.msra.mxu0 0
    %960 = vmatpush.bf16.msra.mxu0 0
    %961 = vmatpush.bf16.msra.mxu0 0
    %962 = vmatpush.bf16.msra.mxu0 %v953
    %963 = vmatmul.bf16.gmra.mxu0 %v950
    %v964 = vpop.f32.mrf.mxu0
    %v965 = vadd.f32 0.0, %v964
    %v966 = vpop.f32.mrf.mxu0
    %967 = vdwg.mxu0
    %v968 = vrcp.pop %v923
    %v969 = vrcp.pop %v926
    %v970 = vmul.f32 %v946, %v968
    %v971 = vmul.f32 %v965, %v969
    %vm972 = vcmask 523264
    %973 = vst.msk [vmem:[#allocation7] sm:$0xff] %vm972, %v970
    %974 = vst.msk [vmem:[#allocation7 + $0x8] sm:$0xff] %vm972, %v971
    // Predicated region
    $region18: #{tpu_custom_call.1} parent=1 // pred_check
      _
    $region19: #{tpu_custom_call.1} parent=1 // pred_check_branch
      %976 = sbr.rel (0) target = $region21
    $region20: #{tpu_custom_call.1} parent=1 // pred_region
      %978 = vsyncadd [#allocation4], 0
      %s979 = sshll.u32 [#allocation7], 4
      %s980 = int_to_ptr.vmem [resolvable:$true] %s979
      %s981 = sshll.u32 %s2, 4
      %s982 = int_to_ptr.hbm [resolvable:$true] %s981
      %987 = dma.vmem_to_hbm [thread:$0]  %s980, 256, %s982, [#allocation4], 128, 128, 8
    $region21: #{tpu_custom_call.1} parent=1 // pred_fallthru
      _
    // Predicated region
    $region22: #{tpu_custom_call.1} parent=1 // pred_check
      _
    $region23: #{tpu_custom_call.1} parent=1 // pred_check_branch
      %989 = sbr.rel (0) target = $region25
    $region24: #{tpu_custom_call.1} parent=1 // pred_region
      %991 = dma.done [#allocation4], 256
    $region25: #{tpu_custom_call.1} parent=1 // pred_fallthru
      _
    %992 = vsyncpa [#allocation3], 1
    %993 = vsyncpa [#allocation6], 1
    %994 = vsyncpa [#allocation4], 1

// kernel: tpu_custom_call.1
$region0: #{tpu_custom_call.1}
  #allocation0 [shape = 'u32[]', space=smem, size = 0x4, offset = 0x4, fixed_abs, tag = 'smem constant byte address 0x4 - core index']
  #allocation1 [shape = 'u32[72,128]{1,0:T(1,128)}', space=vmem, size = 0x9000, scoped, tag = 'internal scratch']
  %s0 = inlined_call_operand.hbm [shape: f32[16,512], index: 0, kind: input, shape index: {}]
  %s1 = inlined_call_operand.hbm [shape: bf16[512,384], index: 1, kind: input, shape index: {}]
  %s2 = inlined_call_operand.hbm [shape: f32[16,64], index: 2, kind: output, shape index: {}]
  %s3 = sld [smem:[#allocation0]]
  $region26: #{tpu_custom_call.1} parent=0
    _
  %s5 = ssub.s32 1, %s3
  %s6 = scalar_select 0, %s5, %s3
  $region1: #{tpu_custom_call.1} parent=0
    #allocation2 [shape = 'u8[32768]{0}', space=vmem, size = 0x8000, scoped, tag = 'input window, operand 0, single buffered']
    #allocation3 [shape = 's32[1]{0}', space=sflag, size = 0x4, scoped, tag = 'scoped memory for tpu_custom_call.1']
    #allocation4 [shape = 's32[1]{0}', space=sflag, size = 0x4, scoped, tag = 'scoped memory for tpu_custom_call.1']
    #allocation5 [shape = 'u8[393216]{0}', space=vmem, size = 0x60000, scoped, tag = 'input window, operand 1, single buffered']
    #allocation6 [shape = 's32[1]{0}', space=sflag, size = 0x4, scoped, tag = 'scoped memory for tpu_custom_call.1']
    #allocation7 [shape = 'u8[8192]{0}', space=vmem, size = 0x2000, scoped, tag = 'output window, operand 0, single buffered']
    %7 = vsyncpa [#allocation3], 0
    %8 = vsyncpa [#allocation6], 0
    %9 = vsyncpa [#allocation4], 0
    // Predicated region
    $region2: #{tpu_custom_call.1} parent=1 // pred_check
      _
    $region3: #{tpu_custom_call.1} parent=1 // pred_check_branch
      %11 = sbr.rel (0) target = $region5
    $region4: #{tpu_custom_call.1} parent=1 // pred_region
      %13 = vsyncadd [#allocation3], 0
      %s14 = sshll.u32 %s0, 4
      %s15 = int_to_ptr.hbm [resolvable:$true] %s14
      %s16 = sshll.u32 [#allocation2], 4
      %s17 = int_to_ptr.vmem [resolvable:$true] %s16
      %22 = dma.hbm_to_vmem [thread:$0]  %s15, 1024, %s17, [#allocation3], 512, 512, 32
    $region5: #{tpu_custom_call.1} parent=1 // pred_fallthru
      _
    // Predicated region
    $region6: #{tpu_custom_call.1} parent=1 // pred_check
      _
    $region7: #{tpu_custom_call.1} parent=1 // pred_check_branch
      %24 = sbr.rel (0) target = $region9
    $region8: #{tpu_custom_call.1} parent=1 // pred_region
      %26 = vsyncadd [#allocation6], 0
      %s27 = sshll.u32 %s1, 4
      %s28 = int_to_ptr.hbm [resolvable:$true] %s27
      %s29 = sshll.u32 [#allocation5], 4
      %s30 = int_to_ptr.vmem [resolvable:$true] %s29
      %35 = dma.hbm_to_vmem [thread:$0]  %s28, 12288, %s30, [#allocation6], 192, 192, 12
    $region9: #{tpu_custom_call.1} parent=1 // pred_fallthru
      _
    // Predicated region
    $region10: #{tpu_custom_call.1} parent=1 // pred_check
      _
    $region11: #{tpu_custom_call.1} parent=1 // pred_check_branch
      %37 = sbr.rel (0) target = $region13
    $region12: #{tpu_custom_call.1} parent=1 // pred_region
      %39 = dma.done [#allocation3], 1024
    $region13: #{tpu_custom_call.1} parent=1 // pred_fallthru
      _
    // Predicated region
    $region14: #{tpu_custom_call.1} parent=1 // pred_check
      _
    $region15: #{tpu_custom_call.1} parent=1 // pred_check_branch
      %41 = sbr.rel (0) target = $region17
    $region16: #{tpu_custom_call.1} parent=1 // pred_region
      %43 = dma.done [#allocation6], 12288
    $region17: #{tpu_custom_call.1} parent=1 // pred_fallthru
      _
    %v45 = vld [vmem:[#allocation2] sm:$0xff]
    %v46 = vld [vmem:[#allocation2 + $0x8] sm:$0xff]
    %v47 = vld [vmem:[#allocation2 + $0x10] sm:$0xff]
    %v48 = vld [vmem:[#allocation2 + $0x18] sm:$0xff]
    %v49 = vld [vmem:[#allocation2 + $0x20] sm:$0xff]
    %v50 = vld [vmem:[#allocation2 + $0x28] sm:$0xff]
    %v51 = vld [vmem:[#allocation2 + $0x30] sm:$0xff]
    %v52 = vld [vmem:[#allocation2 + $0x38] sm:$0xff]
    %v53 = vpack.c.bf16 %v49, %v45
    %v54 = vpack.c.bf16 %v50, %v46
    %v55 = vpack.c.bf16 %v51, %v47
    %v56 = vpack.c.bf16 %v52, %v48
    %v57 = vld [vmem:[#allocation5] sm:$0xff]
    %v58 = vld [vmem:[#allocation5 + $0x8] sm:$0xf]
    %v59 = vld [vmem:[#allocation5 + $0xc] sm:$0xff]
    %v60 = vld [vmem:[#allocation5 + $0x14] sm:$0xf]
    %v61 = vld [vmem:[#allocation5 + $0x18] sm:$0xff]
    %v62 = vld [vmem:[#allocation5 + $0x20] sm:$0xf]
    %v63 = vld [vmem:[#allocation5 + $0x24] sm:$0xff]
    %v64 = vld [vmem:[#allocation5 + $0x2c] sm:$0xf]
    %v65 = vld [vmem:[#allocation5 + $0x30] sm:$0xff]
    %v66 = vld [vmem:[#allocation5 + $0x38] sm:$0xf]
    %v67 = vld [vmem:[#allocation5 + $0x3c] sm:$0xff]
    %v68 = vld [vmem:[#allocation5 + $0x44] sm:$0xf]
    %v69 = vld [vmem:[#allocation5 + $0x48] sm:$0xff]
    %v70 = vld [vmem:[#allocation5 + $0x50] sm:$0xf]
    %v71 = vld [vmem:[#allocation5 + $0x54] sm:$0xff]
    %v72 = vld [vmem:[#allocation5 + $0x5c] sm:$0xf]
    %v73 = vld [vmem:[#allocation5 + $0x60] sm:$0xff]
    %v74 = vld [vmem:[#allocation5 + $0x68] sm:$0xf]
    %v75 = vld [vmem:[#allocation5 + $0x6c] sm:$0xff]
    %v76 = vld [vmem:[#allocation5 + $0x74] sm:$0xf]
    %v77 = vld [vmem:[#allocation5 + $0x78] sm:$0xff]
    %v78 = vld [vmem:[#allocation5 + $0x80] sm:$0xf]
    %v79 = vld [vmem:[#allocation5 + $0x84] sm:$0xff]
    %v80 = vld [vmem:[#allocation5 + $0x8c] sm:$0xf]
    %v81 = vld [vmem:[#allocation5 + $0x90] sm:$0xff]
    %v82 = vld [vmem:[#allocation5 + $0x98] sm:$0xf]
    %v83 = vld [vmem:[#allocation5 + $0x9c] sm:$0xff]
    %v84 = vld [vmem:[#allocation5 + $0xa4] sm:$0xf]
    %v85 = vld [vmem:[#allocation5 + $0xa8] sm:$0xff]
    %v86 = vld [vmem:[#allocation5 + $0xb0] sm:$0xf]
    %v87 = vld [vmem:[#allocation5 + $0xb4] sm:$0xff]
    %v88 = vld [vmem:[#allocation5 + $0xbc] sm:$0xf]
    %v89 = vld [vmem:[#allocation5 + $0xc0] sm:$0xff]
    %v90 = vld [vmem:[#allocation5 + $0xc8] sm:$0xf]
    %v91 = vld [vmem:[#allocation5 + $0xcc] sm:$0xff]
    %v92 = vld [vmem:[#allocation5 + $0xd4] sm:$0xf]
    %v93 = vld [vmem:[#allocation5 + $0xd8] sm:$0xff]
    %v94 = vld [vmem:[#allocation5 + $0xe0] sm:$0xf]
    %v95 = vld [vmem:[#allocation5 + $0xe4] sm:$0xff]
    %v96 = vld [vmem:[#allocation5 + $0xec] sm:$0xf]
    %v97 = vld [vmem:[#allocation5 + $0xf0] sm:$0xff]
    %v98 = vld [vmem:[#allocation5 + $0xf8] sm:$0xf]
    %v99 = vld [vmem:[#allocation5 + $0xfc] sm:$0xff]
    %v100 = vld [vmem:[#allocation5 + $0x104] sm:$0xf]
    %v101 = vld [vmem:[#allocation5 + $0x108] sm:$0xff]
    %v102 = vld [vmem:[#allocation5 + $0x110] sm:$0xf]
    %v103 = vld [vmem:[#allocation5 + $0x114] sm:$0xff]
    %v104 = vld [vmem:[#allocation5 + $0x11c] sm:$0xf]
    %v105 = vld [vmem:[#allocation5 + $0x120] sm:$0xff]
    %v106 = vld [vmem:[#allocation5 + $0x128] sm:$0xf]
    %v107 = vld [vmem:[#allocation5 + $0x12c] sm:$0xff]
    %v108 = vld [vmem:[#allocation5 + $0x134] sm:$0xf]
    %v109 = vld [vmem:[#allocation5 + $0x138] sm:$0xff]
    %v110 = vld [vmem:[#allocation5 + $0x140] sm:$0xf]
    %v111 = vld [vmem:[#allocation5 + $0x144] sm:$0xff]
    %v112 = vld [vmem:[#allocation5 + $0x14c] sm:$0xf]
    %v113 = vld [vmem:[#allocation5 + $0x150] sm:$0xff]
    %v114 = vld [vmem:[#allocation5 + $0x158] sm:$0xf]
    %v115 = vld [vmem:[#allocation5 + $0x15c] sm:$0xff]
    %v116 = vld [vmem:[#allocation5 + $0x164] sm:$0xf]
    %v117 = vld [vmem:[#allocation5 + $0x168] sm:$0xff]
    %v118 = vld [vmem:[#allocation5 + $0x170] sm:$0xf]
    %v119 = vld [vmem:[#allocation5 + $0x174] sm:$0xff]
    %v120 = vld [vmem:[#allocation5 + $0x17c] sm:$0xf]
    %v121 = vld [vmem:[#allocation5 + $0x180] sm:$0xff]
    %v122 = vld [vmem:[#allocation5 + $0x188] sm:$0xf]
    %v123 = vld [vmem:[#allocation5 + $0x18c] sm:$0xff]
    %v124 = vld [vmem:[#allocation5 + $0x194] sm:$0xf]
    %v125 = vld [vmem:[#allocation5 + $0x198] sm:$0xff]
    %v126 = vld [vmem:[#allocation5 + $0x1a0] sm:$0xf]
    %v127 = vld [vmem:[#allocation5 + $0x1a4] sm:$0xff]
    %v128 = vld [vmem:[#allocation5 + $0x1ac] sm:$0xf]
    %v129 = vld [vmem:[#allocation5 + $0x1b0] sm:$0xff]
    %v130 = vld [vmem:[#allocation5 + $0x1b8] sm:$0xf]
    %v131 = vld [vmem:[#allocation5 + $0x1bc] sm:$0xff]
    %v132 = vld [vmem:[#allocation5 + $0x1c4] sm:$0xf]
    %v133 = vld [vmem:[#allocation5 + $0x1c8] sm:$0xff]
    %v134 = vld [vmem:[#allocation5 + $0x1d0] sm:$0xf]
    %v135 = vld [vmem:[#allocation5 + $0x1d4] sm:$0xff]
    %v136 = vld [vmem:[#allocation5 + $0x1dc] sm:$0xf]
    %v137 = vld [vmem:[#allocation5 + $0x1e0] sm:$0xff]
    %v138 = vld [vmem:[#allocation5 + $0x1e8] sm:$0xf]
    %v139 = vld [vmem:[#allocation5 + $0x1ec] sm:$0xff]
    %v140 = vld [vmem:[#allocation5 + $0x1f4] sm:$0xf]
    %v141 = vld [vmem:[#allocation5 + $0x1f8] sm:$0xff]
    %v142 = vld [vmem:[#allocation5 + $0x200] sm:$0xf]
    %v143 = vld [vmem:[#allocation5 + $0x204] sm:$0xff]
    %v144 = vld [vmem:[#allocation5 + $0x20c] sm:$0xf]
    %v145 = vld [vmem:[#allocation5 + $0x210] sm:$0xff]
    %v146 = vld [vmem:[#allocation5 + $0x218] sm:$0xf]
    %v147 = vld [vmem:[#allocation5 + $0x21c] sm:$0xff]
    %v148 = vld [vmem:[#allocation5 + $0x224] sm:$0xf]
    %v149 = vld [vmem:[#allocation5 + $0x228] sm:$0xff]
    %v150 = vld [vmem:[#allocation5 + $0x230] sm:$0xf]
    %v151 = vld [vmem:[#allocation5 + $0x234] sm:$0xff]
    %v152 = vld [vmem:[#allocation5 + $0x23c] sm:$0xf]
    %v153 = vld [vmem:[#allocation5 + $0x240] sm:$0xff]
    %v154 = vld [vmem:[#allocation5 + $0x248] sm:$0xf]
    %v155 = vld [vmem:[#allocation5 + $0x24c] sm:$0xff]
    %v156 = vld [vmem:[#allocation5 + $0x254] sm:$0xf]
    %v157 = vld [vmem:[#allocation5 + $0x258] sm:$0xff]
    %v158 = vld [vmem:[#allocation5 + $0x260] sm:$0xf]
    %v159 = vld [vmem:[#allocation5 + $0x264] sm:$0xff]
    %v160 = vld [vmem:[#allocation5 + $0x26c] sm:$0xf]
    %v161 = vld [vmem:[#allocation5 + $0x270] sm:$0xff]
    %v162 = vld [vmem:[#allocation5 + $0x278] sm:$0xf]
    %v163 = vld [vmem:[#allocation5 + $0x27c] sm:$0xff]
    %v164 = vld [vmem:[#allocation5 + $0x284] sm:$0xf]
    %v165 = vld [vmem:[#allocation5 + $0x288] sm:$0xff]
    %v166 = vld [vmem:[#allocation5 + $0x290] sm:$0xf]
    %v167 = vld [vmem:[#allocation5 + $0x294] sm:$0xff]
    %v168 = vld [vmem:[#allocation5 + $0x29c] sm:$0xf]
    %v169 = vld [vmem:[#allocation5 + $0x2a0] sm:$0xff]
    %v170 = vld [vmem:[#allocation5 + $0x2a8] sm:$0xf]
    %v171 = vld [vmem:[#allocation5 + $0x2ac] sm:$0xff]
    %v172 = vld [vmem:[#allocation5 + $0x2b4] sm:$0xf]
    %v173 = vld [vmem:[#allocation5 + $0x2b8] sm:$0xff]
    %v174 = vld [vmem:[#allocation5 + $0x2c0] sm:$0xf]
    %v175 = vld [vmem:[#allocation5 + $0x2c4] sm:$0xff]
    %v176 = vld [vmem:[#allocation5 + $0x2cc] sm:$0xf]
    %v177 = vld [vmem:[#allocation5 + $0x2d0] sm:$0xff]
    %v178 = vld [vmem:[#allocation5 + $0x2d8] sm:$0xf]
    %v179 = vld [vmem:[#allocation5 + $0x2dc] sm:$0xff]
    %v180 = vld [vmem:[#allocation5 + $0x2e4] sm:$0xf]
    %v181 = vld [vmem:[#allocation5 + $0x2e8] sm:$0xff]
    %v182 = vld [vmem:[#allocation5 + $0x2f0] sm:$0xf]
    %v183 = vld [vmem:[#allocation5 + $0x2f4] sm:$0xff]
    %v184 = vld [vmem:[#allocation5 + $0x2fc] sm:$0xf]
    %v313 = vunpack.c.l.b16 %v57
    %v314 = vunpack.c.h.b16 %v57
    %v315 = vunpack.c.l.b16 %v58
    %v316 = vunpack.c.l.b16 %v59
    %v317 = vunpack.c.h.b16 %v59
    %v318 = vunpack.c.l.b16 %v60
    %v319 = vunpack.c.l.b16 %v61
    %v320 = vunpack.c.h.b16 %v61
    %v321 = vunpack.c.l.b16 %v62
    %v322 = vunpack.c.l.b16 %v63
    %v323 = vunpack.c.h.b16 %v63
    %v324 = vunpack.c.l.b16 %v64
    %v325 = vunpack.c.l.b16 %v65
    %v326 = vunpack.c.h.b16 %v65
    %v327 = vunpack.c.l.b16 %v66
    %v328 = vunpack.c.l.b16 %v67
    %v329 = vunpack.c.h.b16 %v67
    %v330 = vunpack.c.l.b16 %v68
    %v331 = vunpack.c.l.b16 %v69
    %v332 = vunpack.c.h.b16 %v69
    %v333 = vunpack.c.l.b16 %v70
    %v334 = vunpack.c.l.b16 %v71
    %v335 = vunpack.c.h.b16 %v71
    %v336 = vunpack.c.l.b16 %v72
    %v337 = vunpack.c.l.b16 %v73
    %v338 = vunpack.c.h.b16 %v73
    %v339 = vunpack.c.l.b16 %v74
    %v340 = vunpack.c.l.b16 %v75
    %v341 = vunpack.c.h.b16 %v75
    %v342 = vunpack.c.l.b16 %v76
    %v343 = vunpack.c.l.b16 %v77
    %v344 = vunpack.c.h.b16 %v77
    %v345 = vunpack.c.l.b16 %v78
    %v346 = vunpack.c.l.b16 %v79
    %v347 = vunpack.c.h.b16 %v79
    %v348 = vunpack.c.l.b16 %v80
    %v349 = vunpack.c.l.b16 %v81
    %v350 = vunpack.c.h.b16 %v81
    %v351 = vunpack.c.l.b16 %v82
    %v352 = vunpack.c.l.b16 %v83
    %v353 = vunpack.c.h.b16 %v83
    %v354 = vunpack.c.l.b16 %v84
    %v355 = vunpack.c.l.b16 %v85
    %v356 = vunpack.c.h.b16 %v85
    %v357 = vunpack.c.l.b16 %v86
    %v358 = vunpack.c.l.b16 %v87
    %v359 = vunpack.c.h.b16 %v87
    %v360 = vunpack.c.l.b16 %v88
    %v361 = vunpack.c.l.b16 %v89
    %v362 = vunpack.c.h.b16 %v89
    %v363 = vunpack.c.l.b16 %v90
    %v364 = vunpack.c.l.b16 %v91
    %v365 = vunpack.c.h.b16 %v91
    %v366 = vunpack.c.l.b16 %v92
    %v367 = vunpack.c.l.b16 %v93
    %v368 = vunpack.c.h.b16 %v93
    %v369 = vunpack.c.l.b16 %v94
    %v370 = vunpack.c.l.b16 %v95
    %v371 = vunpack.c.h.b16 %v95
    %v372 = vunpack.c.l.b16 %v96
    %v373 = vunpack.c.l.b16 %v97
    %v374 = vunpack.c.h.b16 %v97
    %v375 = vunpack.c.l.b16 %v98
    %v376 = vunpack.c.l.b16 %v99
    %v377 = vunpack.c.h.b16 %v99
    %v378 = vunpack.c.l.b16 %v100
    %v379 = vunpack.c.l.b16 %v101
    %v380 = vunpack.c.h.b16 %v101
    %v381 = vunpack.c.l.b16 %v102
    %v382 = vunpack.c.l.b16 %v103
    %v383 = vunpack.c.h.b16 %v103
    %v384 = vunpack.c.l.b16 %v104
    %v385 = vunpack.c.l.b16 %v105
    %v386 = vunpack.c.h.b16 %v105
    %v387 = vunpack.c.l.b16 %v106
    %v388 = vunpack.c.l.b16 %v107
    %v389 = vunpack.c.h.b16 %v107
    %v390 = vunpack.c.l.b16 %v108
    %v391 = vunpack.c.l.b16 %v109
    %v392 = vunpack.c.h.b16 %v109
    %v393 = vunpack.c.l.b16 %v110
    %v394 = vunpack.c.l.b16 %v111
    %v395 = vunpack.c.h.b16 %v111
    %v396 = vunpack.c.l.b16 %v112
    %v397 = vunpack.c.l.b16 %v113
    %v398 = vunpack.c.h.b16 %v113
    %v399 = vunpack.c.l.b16 %v114
    %v400 = vunpack.c.l.b16 %v115
    %v401 = vunpack.c.h.b16 %v115
    %v402 = vunpack.c.l.b16 %v116
    %v403 = vunpack.c.l.b16 %v117
    %v404 = vunpack.c.h.b16 %v117
    %v405 = vunpack.c.l.b16 %v118
    %v406 = vunpack.c.l.b16 %v119
    %v407 = vunpack.c.h.b16 %v119
    %v408 = vunpack.c.l.b16 %v120
    %v409 = vunpack.c.l.b16 %v121
    %v410 = vunpack.c.h.b16 %v121
    %v411 = vunpack.c.l.b16 %v122
    %v412 = vunpack.c.l.b16 %v123
    %v413 = vunpack.c.h.b16 %v123
    %v414 = vunpack.c.l.b16 %v124
    %v415 = vunpack.c.l.b16 %v125
    %v416 = vunpack.c.h.b16 %v125
    %v417 = vunpack.c.l.b16 %v126
    %v418 = vunpack.c.l.b16 %v127
    %v419 = vunpack.c.h.b16 %v127
    %v420 = vunpack.c.l.b16 %v128
    %v421 = vunpack.c.l.b16 %v129
    %v422 = vunpack.c.h.b16 %v129
    %v423 = vunpack.c.l.b16 %v130
    %v424 = vunpack.c.l.b16 %v131
    %v425 = vunpack.c.h.b16 %v131
    %v426 = vunpack.c.l.b16 %v132
    %v427 = vunpack.c.l.b16 %v133
    %v428 = vunpack.c.h.b16 %v133
    %v429 = vunpack.c.l.b16 %v134
    %v430 = vunpack.c.l.b16 %v135
    %v431 = vunpack.c.h.b16 %v135
    %v432 = vunpack.c.l.b16 %v136
    %v433 = vunpack.c.l.b16 %v137
    %v434 = vunpack.c.h.b16 %v137
    %v435 = vunpack.c.l.b16 %v138
    %v436 = vunpack.c.l.b16 %v139
    %v437 = vunpack.c.h.b16 %v139
    %v438 = vunpack.c.l.b16 %v140
    %v439 = vunpack.c.l.b16 %v141
    %v440 = vunpack.c.h.b16 %v141
    %v441 = vunpack.c.l.b16 %v142
    %v442 = vunpack.c.l.b16 %v143
    %v443 = vunpack.c.h.b16 %v143
    %v444 = vunpack.c.l.b16 %v144
    %v445 = vunpack.c.l.b16 %v145
    %v446 = vunpack.c.h.b16 %v145
    %v447 = vunpack.c.l.b16 %v146
    %v448 = vunpack.c.l.b16 %v147
    %v449 = vunpack.c.h.b16 %v147
    %v450 = vunpack.c.l.b16 %v148
    %v451 = vunpack.c.l.b16 %v149
    %v452 = vunpack.c.h.b16 %v149
    %v453 = vunpack.c.l.b16 %v150
    %v454 = vunpack.c.l.b16 %v151
    %v455 = vunpack.c.h.b16 %v151
    %v456 = vunpack.c.l.b16 %v152
    %v457 = vunpack.c.l.b16 %v153
    %v458 = vunpack.c.h.b16 %v153
    %v459 = vunpack.c.l.b16 %v154
    %v460 = vunpack.c.l.b16 %v155
    %v461 = vunpack.c.h.b16 %v155
    %v462 = vunpack.c.l.b16 %v156
    %v463 = vunpack.c.l.b16 %v157
    %v464 = vunpack.c.h.b16 %v157
    %v465 = vunpack.c.l.b16 %v158
    %v466 = vunpack.c.l.b16 %v159
    %v467 = vunpack.c.h.b16 %v159
    %v468 = vunpack.c.l.b16 %v160
    %v469 = vunpack.c.l.b16 %v161
    %v470 = vunpack.c.h.b16 %v161
    %v471 = vunpack.c.l.b16 %v162
    %v472 = vunpack.c.l.b16 %v163
    %v473 = vunpack.c.h.b16 %v163
    %v474 = vunpack.c.l.b16 %v164
    %v475 = vunpack.c.l.b16 %v165
    %v476 = vunpack.c.h.b16 %v165
    %v477 = vunpack.c.l.b16 %v166
    %v478 = vunpack.c.l.b16 %v167
    %v479 = vunpack.c.h.b16 %v167
    %v480 = vunpack.c.l.b16 %v168
    %v481 = vunpack.c.l.b16 %v169
    %v482 = vunpack.c.h.b16 %v169
    %v483 = vunpack.c.l.b16 %v170
    %v484 = vunpack.c.l.b16 %v171
    %v485 = vunpack.c.h.b16 %v171
    %v486 = vunpack.c.l.b16 %v172
    %v487 = vunpack.c.l.b16 %v173
    %v488 = vunpack.c.h.b16 %v173
    %v489 = vunpack.c.l.b16 %v174
    %v490 = vunpack.c.l.b16 %v175
    %v491 = vunpack.c.h.b16 %v175
    %v492 = vunpack.c.l.b16 %v176
    %v493 = vunpack.c.l.b16 %v177
    %v494 = vunpack.c.h.b16 %v177
    %v495 = vunpack.c.l.b16 %v178
    %v496 = vunpack.c.l.b16 %v179
    %v497 = vunpack.c.h.b16 %v179
    %v498 = vunpack.c.l.b16 %v180
    %v499 = vunpack.c.l.b16 %v181
    %v500 = vunpack.c.h.b16 %v181
    %v501 = vunpack.c.l.b16 %v182
    %v502 = vunpack.c.l.b16 %v183
    %v503 = vunpack.c.h.b16 %v183
    %v504 = vunpack.c.l.b16 %v184
    %v505 = vpack.c.b16 %v316, %v313
    %v506 = vpack.c.b16 %v317, %v314
    %v507 = vpack.c.b16 %v318, %v315
    %v508 = vpack.c.b16 %v322, %v319
    %v509 = vpack.c.b16 %v323, %v320
    %v510 = vpack.c.b16 %v324, %v321
    %v511 = vpack.c.b16 %v328, %v325
    %v512 = vpack.c.b16 %v329, %v326
    %v513 = vpack.c.b16 %v330, %v327
    %v514 = vpack.c.b16 %v334, %v331
    %v515 = vpack.c.b16 %v335, %v332
    %v516 = vpack.c.b16 %v336, %v333
    %v517 = vpack.c.b16 %v340, %v337
    %v518 = vpack.c.b16 %v341, %v338
    %v519 = vpack.c.b16 %v342, %v339
    %v520 = vpack.c.b16 %v346, %v343
    %v521 = vpack.c.b16 %v347, %v344
    %v522 = vpack.c.b16 %v348, %v345
    %v523 = vpack.c.b16 %v352, %v349
    %v524 = vpack.c.b16 %v353, %v350
    %v525 = vpack.c.b16 %v354, %v351
    %v526 = vpack.c.b16 %v358, %v355
    %v527 = vpack.c.b16 %v359, %v356
    %v528 = vpack.c.b16 %v360, %v357
    %v529 = vpack.c.b16 %v364, %v361
    %v530 = vpack.c.b16 %v365, %v362
    %v531 = vpack.c.b16 %v366, %v363
    %v532 = vpack.c.b16 %v370, %v367
    %v533 = vpack.c.b16 %v371, %v368
    %v534 = vpack.c.b16 %v372, %v369
    %v535 = vpack.c.b16 %v376, %v373
    %v536 = vpack.c.b16 %v377, %v374
    %v537 = vpack.c.b16 %v378, %v375
    %v538 = vpack.c.b16 %v382, %v379
    %v539 = vpack.c.b16 %v383, %v380
    %v540 = vpack.c.b16 %v384, %v381
    %v541 = vpack.c.b16 %v388, %v385
    %v542 = vpack.c.b16 %v389, %v386
    %v543 = vpack.c.b16 %v390, %v387
    %v544 = vpack.c.b16 %v394, %v391
    %v545 = vpack.c.b16 %v395, %v392
    %v546 = vpack.c.b16 %v396, %v393
    %v547 = vpack.c.b16 %v400, %v397
    %v548 = vpack.c.b16 %v401, %v398
    %v549 = vpack.c.b16 %v402, %v399
    %v550 = vpack.c.b16 %v406, %v403
    %v551 = vpack.c.b16 %v407, %v404
    %v552 = vpack.c.b16 %v408, %v405
    %v553 = vpack.c.b16 %v412, %v409
    %v554 = vpack.c.b16 %v413, %v410
    %v555 = vpack.c.b16 %v414, %v411
    %v556 = vpack.c.b16 %v418, %v415
    %v557 = vpack.c.b16 %v419, %v416
    %v558 = vpack.c.b16 %v420, %v417
    %v559 = vpack.c.b16 %v424, %v421
    %v560 = vpack.c.b16 %v425, %v422
    %v561 = vpack.c.b16 %v426, %v423
    %v562 = vpack.c.b16 %v430, %v427
    %v563 = vpack.c.b16 %v431, %v428
    %v564 = vpack.c.b16 %v432, %v429
    %v565 = vpack.c.b16 %v436, %v433
    %v566 = vpack.c.b16 %v437, %v434
    %v567 = vpack.c.b16 %v438, %v435
    %v568 = vpack.c.b16 %v442, %v439
    %v569 = vpack.c.b16 %v443, %v440
    %v570 = vpack.c.b16 %v444, %v441
    %v571 = vpack.c.b16 %v448, %v445
    %v572 = vpack.c.b16 %v449, %v446
    %v573 = vpack.c.b16 %v450, %v447
    %v574 = vpack.c.b16 %v454, %v451
    %v575 = vpack.c.b16 %v455, %v452
    %v576 = vpack.c.b16 %v456, %v453
    %v577 = vpack.c.b16 %v460, %v457
    %v578 = vpack.c.b16 %v461, %v458
    %v579 = vpack.c.b16 %v462, %v459
    %v580 = vpack.c.b16 %v466, %v463
    %v581 = vpack.c.b16 %v467, %v464
    %v582 = vpack.c.b16 %v468, %v465
    %v583 = vpack.c.b16 %v472, %v469
    %v584 = vpack.c.b16 %v473, %v470
    %v585 = vpack.c.b16 %v474, %v471
    %v586 = vpack.c.b16 %v478, %v475
    %v587 = vpack.c.b16 %v479, %v476
    %v588 = vpack.c.b16 %v480, %v477
    %v589 = vpack.c.b16 %v484, %v481
    %v590 = vpack.c.b16 %v485, %v482
    %v591 = vpack.c.b16 %v486, %v483
    %v592 = vpack.c.b16 %v490, %v487
    %v593 = vpack.c.b16 %v491, %v488
    %v594 = vpack.c.b16 %v492, %v489
    %v595 = vpack.c.b16 %v496, %v493
    %v596 = vpack.c.b16 %v497, %v494
    %v597 = vpack.c.b16 %v498, %v495
    %v598 = vpack.c.b16 %v502, %v499
    %v599 = vpack.c.b16 %v503, %v500
    %v600 = vpack.c.b16 %v504, %v501
    %697 = vmatpush.bf16.msra.mxu0 %v526
    %698 = vmatpush.bf16.msra.mxu0 %v523
    %699 = vmatpush.bf16.msra.mxu0 %v520
    %700 = vmatpush.bf16.msra.mxu0 %v517
    %701 = vmatpush.bf16.msra.mxu0 %v514
    %702 = vmatpush.bf16.msra.mxu0 %v511
    %703 = vmatpush.bf16.msra.mxu0 %v508
    %704 = vmatpush.bf16.msra.mxu0 %v505
    %705 = vmatmul.bf16.gmra.mxu0 %v53
    %v706 = vpop.f32.mrf.mxu0
    %v707 = vadd.f32 0.0, %v706
    %v708 = vpop.f32.mrf.mxu0
    %v709 = vadd.f32 0.0, %v708
    %710 = vdwg.mxu0
    %711 = vmatpush.bf16.msra.mxu0 %v550
    %712 = vmatpush.bf16.msra.mxu0 %v547
    %713 = vmatpush.bf16.msra.mxu0 %v544
    %714 = vmatpush.bf16.msra.mxu0 %v541
    %715 = vmatpush.bf16.msra.mxu0 %v538
    %716 = vmatpush.bf16.msra.mxu0 %v535
    %717 = vmatpush.bf16.msra.mxu0 %v532
    %718 = vmatpush.bf16.msra.mxu0 %v529
    %719 = vmatmul.bf16.gmra.mxu0 %v54
    %v720 = vpop.f32.mrf.mxu0
    %v721 = vadd.f32 %v707, %v720
    %v722 = vpop.f32.mrf.mxu0
    %v723 = vadd.f32 %v709, %v722
    %724 = vdwg.mxu0
    %725 = vmatpush.bf16.msra.mxu0 %v574
    %726 = vmatpush.bf16.msra.mxu0 %v571
    %727 = vmatpush.bf16.msra.mxu0 %v568
    %728 = vmatpush.bf16.msra.mxu0 %v565
    %729 = vmatpush.bf16.msra.mxu0 %v562
    %730 = vmatpush.bf16.msra.mxu0 %v559
    %731 = vmatpush.bf16.msra.mxu0 %v556
    %732 = vmatpush.bf16.msra.mxu0 %v553
    %733 = vmatmul.bf16.gmra.mxu0 %v55
    %v734 = vpop.f32.mrf.mxu0
    %v735 = vadd.f32 %v721, %v734
    %v736 = vpop.f32.mrf.mxu0
    %v737 = vadd.f32 %v723, %v736
    %738 = vdwg.mxu0
    %739 = vmatpush.bf16.msra.mxu0 %v598
    %740 = vmatpush.bf16.msra.mxu0 %v595
    %741 = vmatpush.bf16.msra.mxu0 %v592
    %742 = vmatpush.bf16.msra.mxu0 %v589
    %743 = vmatpush.bf16.msra.mxu0 %v586
    %744 = vmatpush.bf16.msra.mxu0 %v583
    %745 = vmatpush.bf16.msra.mxu0 %v580
    %746 = vmatpush.bf16.msra.mxu0 %v577
    %747 = vmatmul.bf16.gmra.mxu0 %v56
    %v748 = vpop.f32.mrf.mxu0
    %v749 = vadd.f32 %v735, %v748
    %v750 = vpop.f32.mrf.mxu0
    %v751 = vadd.f32 %v737, %v750
    %752 = vdwg.mxu0
    %753 = vmatpush.bf16.msra.mxu0 %v527
    %754 = vmatpush.bf16.msra.mxu0 %v524
    %755 = vmatpush.bf16.msra.mxu0 %v521
    %756 = vmatpush.bf16.msra.mxu0 %v518
    %757 = vmatpush.bf16.msra.mxu0 %v515
    %758 = vmatpush.bf16.msra.mxu0 %v512
    %759 = vmatpush.bf16.msra.mxu0 %v509
    %760 = vmatpush.bf16.msra.mxu0 %v506
    %761 = vmatmul.bf16.gmra.mxu0 %v53
    %v762 = vpop.f32.mrf.mxu0
    %v763 = vadd.f32 0.0, %v762
    %v764 = vpop.f32.mrf.mxu0
    %v765 = vadd.f32 0.0, %v764
    %766 = vdwg.mxu0
    %767 = vmatpush.bf16.msra.mxu0 %v551
    %768 = vmatpush.bf16.msra.mxu0 %v548
    %769 = vmatpush.bf16.msra.mxu0 %v545
    %770 = vmatpush.bf16.msra.mxu0 %v542
    %771 = vmatpush.bf16.msra.mxu0 %v539
    %772 = vmatpush.bf16.msra.mxu0 %v536
    %773 = vmatpush.bf16.msra.mxu0 %v533
    %774 = vmatpush.bf16.msra.mxu0 %v530
    %775 = vmatmul.bf16.gmra.mxu0 %v54
    %v776 = vpop.f32.mrf.mxu0
    %v777 = vadd.f32 %v763, %v776
    %v778 = vpop.f32.mrf.mxu0
    %v779 = vadd.f32 %v765, %v778
    %780 = vdwg.mxu0
    %781 = vmatpush.bf16.msra.mxu0 %v575
    %782 = vmatpush.bf16.msra.mxu0 %v572
    %783 = vmatpush.bf16.msra.mxu0 %v569
    %784 = vmatpush.bf16.msra.mxu0 %v566
    %785 = vmatpush.bf16.msra.mxu0 %v563
    %786 = vmatpush.bf16.msra.mxu0 %v560
    %787 = vmatpush.bf16.msra.mxu0 %v557
    %788 = vmatpush.bf16.msra.mxu0 %v554
    %789 = vmatmul.bf16.gmra.mxu0 %v55
    %v790 = vpop.f32.mrf.mxu0
    %v791 = vadd.f32 %v777, %v790
    %v792 = vpop.f32.mrf.mxu0
    %v793 = vadd.f32 %v779, %v792
    %794 = vdwg.mxu0
    %795 = vmatpush.bf16.msra.mxu0 %v599
    %796 = vmatpush.bf16.msra.mxu0 %v596
    %797 = vmatpush.bf16.msra.mxu0 %v593
    %798 = vmatpush.bf16.msra.mxu0 %v590
    %799 = vmatpush.bf16.msra.mxu0 %v587
    %800 = vmatpush.bf16.msra.mxu0 %v584
    %801 = vmatpush.bf16.msra.mxu0 %v581
    %802 = vmatpush.bf16.msra.mxu0 %v578
    %803 = vmatmul.bf16.gmra.mxu0 %v56
    %v804 = vpop.f32.mrf.mxu0
    %v805 = vadd.f32 %v791, %v804
    %v806 = vpop.f32.mrf.mxu0
    %v807 = vadd.f32 %v793, %v806
    %808 = vdwg.mxu0
    %809 = vmatpush.bf16.msra.mxu0 %v528
    %810 = vmatpush.bf16.msra.mxu0 %v525
    %811 = vmatpush.bf16.msra.mxu0 %v522
    %812 = vmatpush.bf16.msra.mxu0 %v519
    %813 = vmatpush.bf16.msra.mxu0 %v516
    %814 = vmatpush.bf16.msra.mxu0 %v513
    %815 = vmatpush.bf16.msra.mxu0 %v510
    %816 = vmatpush.bf16.msra.mxu0 %v507
    %817 = vmatmul.bf16.gmra.mxu0 %v53
    %v818 = vpop.f32.mrf.mxu0
    %v819 = vadd.f32 0.0, %v818
    %v820 = vpop.f32.mrf.mxu0
    %v821 = vadd.f32 0.0, %v820
    %822 = vdwg.mxu0
    %823 = vmatpush.bf16.msra.mxu0 %v552
    %824 = vmatpush.bf16.msra.mxu0 %v549
    %825 = vmatpush.bf16.msra.mxu0 %v546
    %826 = vmatpush.bf16.msra.mxu0 %v543
    %827 = vmatpush.bf16.msra.mxu0 %v540
    %828 = vmatpush.bf16.msra.mxu0 %v537
    %829 = vmatpush.bf16.msra.mxu0 %v534
    %830 = vmatpush.bf16.msra.mxu0 %v531
    %831 = vmatmul.bf16.gmra.mxu0 %v54
    %v832 = vpop.f32.mrf.mxu0
    %v833 = vadd.f32 %v819, %v832
    %v834 = vpop.f32.mrf.mxu0
    %v835 = vadd.f32 %v821, %v834
    %836 = vdwg.mxu0
    %837 = vmatpush.bf16.msra.mxu0 %v576
    %838 = vmatpush.bf16.msra.mxu0 %v573
    %839 = vmatpush.bf16.msra.mxu0 %v570
    %840 = vmatpush.bf16.msra.mxu0 %v567
    %841 = vmatpush.bf16.msra.mxu0 %v564
    %842 = vmatpush.bf16.msra.mxu0 %v561
    %843 = vmatpush.bf16.msra.mxu0 %v558
    %844 = vmatpush.bf16.msra.mxu0 %v555
    %845 = vmatmul.bf16.gmra.mxu0 %v55
    %v846 = vpop.f32.mrf.mxu0
    %v847 = vadd.f32 %v833, %v846
    %v848 = vpop.f32.mrf.mxu0
    %v849 = vadd.f32 %v835, %v848
    %850 = vdwg.mxu0
    %851 = vmatpush.bf16.msra.mxu0 %v600
    %852 = vmatpush.bf16.msra.mxu0 %v597
    %853 = vmatpush.bf16.msra.mxu0 %v594
    %854 = vmatpush.bf16.msra.mxu0 %v591
    %855 = vmatpush.bf16.msra.mxu0 %v588
    %856 = vmatpush.bf16.msra.mxu0 %v585
    %857 = vmatpush.bf16.msra.mxu0 %v582
    %858 = vmatpush.bf16.msra.mxu0 %v579
    %859 = vmatmul.bf16.gmra.mxu0 %v56
    %v860 = vpop.f32.mrf.mxu0
    %v861 = vadd.f32 %v847, %v860
    %v862 = vpop.f32.mrf.mxu0
    %v863 = vadd.f32 %v849, %v862
    %864 = vdwg.mxu0
    %v865 = vpack.c.bf16 %v749, %v749
    %v866 = vpack.c.bf16 %v751, %v751
    %v867 = vpack.c.bf16 %v805, %v805
    %v868 = vpack.c.bf16 %v807, %v807
    %v869 = vpack.c.bf16 %v861, %v861
    %v870 = vpack.c.bf16 %v863, %v863
    %871 = vmatpush.bf16.xpose.msra.mxu0 0
    %872 = vmatpush.bf16.xpose.msra.mxu0 0
    %873 = vmatpush.bf16.xpose.msra.mxu0 0
    %874 = vmatpush.bf16.xpose.msra.mxu0 0
    %875 = vmatpush.bf16.xpose.msra.mxu0 0
    %876 = vmatpush.bf16.xpose.msra.mxu0 0
    %877 = vmatpush.bf16.xpose.msra.mxu0 0
    %878 = vmatpush.bf16.xpose.msra.mxu0 %v867
    %879 = vmatmul.bf16.gmra.mxu0 %v865
    %v880 = vpop.f32.mrf.mxu0
    %v881 = vadd.f32 0.0, %v880
    %v882 = vpop.f32.mrf.mxu0
    %883 = vdwg.mxu0
    %884 = vmatpush.bf16.xpose.msra.mxu0 0
    %885 = vmatpush.bf16.xpose.msra.mxu0 0
    %886 = vmatpush.bf16.xpose.msra.mxu0 0
    %887 = vmatpush.bf16.xpose.msra.mxu0 0
    %888 = vmatpush.bf16.xpose.msra.mxu0 0
    %889 = vmatpush.bf16.xpose.msra.mxu0 0
    %890 = vmatpush.bf16.xpose.msra.mxu0 0
    %891 = vmatpush.bf16.xpose.msra.mxu0 %v868
    %892 = vmatmul.bf16.gmra.mxu0 %v866
    %v893 = vpop.f32.mrf.mxu0
    %v894 = vadd.f32 0.0, %v893
    %v895 = vpop.f32.mrf.mxu0
    %896 = vdwg.mxu0
    %v897 = vlaneseq
    %v898 = vshrl.u32 %v897, 7
    %v899 = vlaneseq
    %v900 = vand.u32 %v899, 127
    %vm901 = vcmp.le.s32.totalorder %v900, %v898
    %v902 = vsel %vm901, 1, 0
    %vm903 = vcmp.eq.s32.totalorder %v902, 1
    %v904 = vsel %vm903, %v881, -inf
    %v905 = vsel %vm903, %v894, -inf
    %vm906 = vcmask 64512
    %v907 = vsel %vm906, %v904, -inf
    %908 = vmax.xlane.f32.xlu0 %v907
    %v909 = vpop.xlane.xlu0 %908
    %v910 = vsel %vm906, %v905, -inf
    %911 = vmax.xlane.f32.xlu0 %v910
    %v912 = vpop.xlane.xlu0 %911
    %v913 = vsub.f32 %v881, %v909
    %v914 = vsub.f32 %v894, %v912
    %v915 = vmul.f32 %v913, 1.442695
    %v916 = vpow.pop %v915
    %v917 = vmul.f32 %v914, 1.442695
    %v918 = vpow.pop %v917
    %v919 = vsel %vm903, %v916, 0.0
    %v920 = vsel %vm903, %v918, 0.0
    %v921 = vsel %vm906, %v919, 0.0
    %922 = vadd.xlane.f32.xlu0 %v921
    %v923 = vpop.xlane.xlu0 %922
    %v924 = vsel %vm906, %v920, 0.0
    %925 = vadd.xlane.f32.xlu0 %v924
    %v926 = vpop.xlane.xlu0 %925
    %v927 = vpack.c.bf16 %v919, %v919
    %v928 = vpack.c.bf16 %v920, %v920
    %v930 = vsel %vm906, %v927, 0
    %vm932 = vcmask 1043456
    %v934 = vsel %vm932, %v869, 0
    %936 = vmatpush.bf16.msra.mxu0 0
    %937 = vmatpush.bf16.msra.mxu0 0
    %938 = vmatpush.bf16.msra.mxu0 0
    %939 = vmatpush.bf16.msra.mxu0 0
    %940 = vmatpush.bf16.msra.mxu0 0
    %941 = vmatpush.bf16.msra.mxu0 0
    %942 = vmatpush.bf16.msra.mxu0 0
    %943 = vmatpush.bf16.msra.mxu0 %v934
    %944 = vmatmul.bf16.gmra.mxu0 %v930
    %v945 = vpop.f32.mrf.mxu0
    %v946 = vadd.f32 0.0, %v945
    %v947 = vpop.f32.mrf.mxu0
    %948 = vdwg.mxu0
    %v950 = vsel %vm906, %v928, 0
    %v953 = vsel %vm932, %v870, 0
    %955 = vmatpush.bf16.msra.mxu0 0
    %956 = vmatpush.bf16.msra.mxu0 0
    %957 = vmatpush.bf16.msra.mxu0 0
    %958 = vmatpush.bf16.msra.mxu0 0
    %959 = vmatpush.bf16.msra.mxu0 0
    %960 = vmatpush.bf16.msra.mxu0 0
    %961 = vmatpush.bf16.msra.mxu0 0
    %962 = vmatpush.bf16.msra.mxu0 %v953
    %963 = vmatmul.bf16.gmra.mxu0 %v950
    %v964 = vpop.f32.mrf.mxu0
    %v965 = vadd.f32 0.0, %v964
    %v966 = vpop.f32.mrf.mxu0
    %967 = vdwg.mxu0
    %v968 = vrcp.pop %v923
    %v969 = vrcp.pop %v926
    %v970 = vmul.f32 %v946, %v968
    %v971 = vmul.f32 %v965, %v969
    %vm972 = vcmask 523264
    %973 = vst.msk [vmem:[#allocation7] sm:$0xff] %vm972, %v970
    %974 = vst.msk [vmem:[#allocation7 + $0x8] sm:$0xff] %vm972, %v971
    // Predicated region
    $region18: #{tpu_custom_call.1} parent=1 // pred_check
      _
    $region19: #{tpu_custom_call.1} parent=1 // pred_check_branch
      %976 = sbr.rel (0) target = $region21
    $region20: #{tpu_custom_call.1} parent=1 // pred_region
      %978 = vsyncadd [#allocation4], 0
      %s979 = sshll.u32 [#allocation7], 4
      %s980 = int_to_ptr.vmem [resolvable:$true] %s979
      %s981 = sshll.u32 %s2, 4
      %s982 = int_to_ptr.hbm [resolvable:$true] %s981
      %987 = dma.vmem_to_hbm [thread:$0]  %s980, 256, %s982, [#allocation4], 128, 128, 8
    $region21: #{tpu_custom_call.1} parent=1 // pred_fallthru
      _
    // Predicated region
    $region22: #{tpu_custom_call.1} parent=1 // pred_check
      _
    $region23: #{tpu_custom_call.1} parent=1 // pred_check_branch
      %989 = sbr.rel (0) target = $region25
    $region24: #{tpu_custom_call.1} parent=1 // pred_region
      %991 = dma.done [#allocation4], 256
    $region25: #{tpu_custom_call.1} parent=1 // pred_fallthru
      _
    %992 = vsyncpa [#allocation3], 1
    %993 = vsyncpa [#allocation6], 1
    %994 = vsyncpa [#allocation4], 1

</llo_original>
